<compile_context>
chip_gen: v7x
topology: tpu7x:2x2x1
jax: 0.10.0
libtpu: 0.0.40
codegen_flags: <defaults>
</compile_context>

<pallas_src>
import functools

import jax
import jax.numpy as jnp
from jax.experimental import pallas as pl
from jax.experimental.pallas import tpu as pltpu


def _round_up(x, m):
    return ((x + m - 1) // m) * m


def _pick_time_chunk(T, max_chunk=8):
    """Largest divisor of T that is <= max_chunk (amortizes grid-step cost)."""
    for tt in range(min(T, max_chunk), 0, -1):
        if T % tt == 0:
            return tt
    return 1


# ---------------------------------------------------------------------------
# Stage 1 kernel: serial recurrence, TT timesteps per grid point.
# ---------------------------------------------------------------------------
def _recurrent_kernel(xproj_ref, h0_ref, w1h_ref, s1_ref, hlast_ref, h_scratch,
                      *, tt, hp):
    c = pl.program_id(0)

    # Seed the cross-chunk hidden carry from h0 on the first chunk.
    @pl.when(c == 0)
    def _():
        h_scratch[...] = h0_ref[...]

    def step(i, h):
        # s1 = [hidden' | o1] ; only the x-independent part runs serially.
        s1 = (jnp.dot(h.astype(w1h_ref.dtype), w1h_ref[...],
                      preferred_element_type=jnp.float32)
              + xproj_ref[i])
        s1_ref[i] = s1
        return s1[:, :hp]                       # hidden' carried in vregs

    h_out = jax.lax.fori_loop(0, tt, step, h_scratch[...], unroll=True)
    h_scratch[...] = h_out                      # carry to the next chunk

    # Final hidden is only stored once (constant output block index).
    @pl.when(c == pl.num_programs(0) - 1)
    def _():
        hlast_ref[...] = h_out


# ---------------------------------------------------------------------------
# Stage 2 kernel: batched o2o matmul + bias + log_softmax (parallel grid).
# Padded-lane masking is baked into b2 (-1e30), so no iota/where here.
# ---------------------------------------------------------------------------
def _output_kernel(s1_ref, w2_ref, b2_ref, out_ref):
    o = (jnp.dot(s1_ref[...].astype(w2_ref.dtype), w2_ref[...],
                 preferred_element_type=jnp.float32)
         + b2_ref[...])
    # Dropout(p=0.1) is identity in eval mode.
    # TODO(synk): training-mode stochastic dropout (pltpu.prng_*) not implemented.
    m = jnp.max(o, axis=1, keepdims=True)
    s = o - m
    lse = jnp.log(jnp.sum(jnp.exp(s), axis=1, keepdims=True))
    out_ref[...] = (s - lse).astype(out_ref.dtype)


# ---------------------------------------------------------------------------
# One-time parameter preparation (hoisted out of the forward path).
# ---------------------------------------------------------------------------
def prepare_params(params, input_size, hidden_size, output_size,
                   dtype=jnp.float32):
    """dtype=jnp.bfloat16 halves weight DMA/VMEM and hits bf16 MXU rates on
    v6e/v7x (loosen tolerances vs an f32 reference to ~1e-2 if used)."""
    I, H, O = input_size, hidden_size, output_size
    Hp, Op = _round_up(H, 128), _round_up(O, 128)
    HOp = Hp + Op

    w_i2h = params["w_i2h"]            # [H, I+H]  (PyTorch layout: [out, in])
    w_i2o = params["w_i2o"]            # [O, I+H]
    w_o2o = params["w_o2o"]            # [O, H+O]

    # Stage-0 weight: x @ W1x -> x-part of [hidden'|o1].  K = I (UNPADDED).
    W1x = jnp.zeros((I, HOp), dtype)
    W1x = W1x.at[:, :H].set(w_i2h[:, :I].T.astype(dtype))
    W1x = W1x.at[:, Hp:Hp + O].set(w_i2o[:, :I].T.astype(dtype))

    # Stage-1 weight: h @ W1h -> h-part of [hidden'|o1].  VMEM-resident.
    W1h = jnp.zeros((Hp, HOp), dtype)
    W1h = W1h.at[:H, :H].set(w_i2h[:, I:].T.astype(dtype))
    W1h = W1h.at[:H, Hp:Hp + O].set(w_i2o[:, I:].T.astype(dtype))

    b1 = jnp.zeros((1, HOp), jnp.float32)
    b1 = b1.at[0, :H].set(params["b_i2h"])
    b1 = b1.at[0, Hp:Hp + O].set(params["b_i2o"])

    # Stage-2 weight: [hidden'|o1] @ W2 -> out.
    W2 = jnp.zeros((HOp, Op), dtype)
    W2 = W2.at[:H, :O].set(w_o2o[:, :H].T.astype(dtype))
    W2 = W2.at[Hp:Hp + O, :O].set(w_o2o[:, H:].T.astype(dtype))

    # Padded output lanes masked via the bias (-1e30); they are sliced off in
    # the wrapper, so the garbage values in the padded buffer are never read.
    b2 = jnp.full((1, Op), -1e30, jnp.float32)
    b2 = b2.at[0, :O].set(params["b_oo"])

    return {"W1x": W1x, "W1h": W1h, "b1": b1, "W2": W2, "b2": b2,
            "dims": (I, H, O, Hp, Op)}


# ---------------------------------------------------------------------------
# Whole-sequence forward.
# ---------------------------------------------------------------------------
@functools.partial(jax.jit, static_argnames=("dims",))
def _rnn_sequence_impl(xs, h0, w1x, w1h, b1, w2, b2, *, dims):
    I, H, O, Hp, Op = dims
    HOp = Hp + Op
    T, B, _ = xs.shape
    Bp = _round_up(B, 8)

    # ---- Stage 0: batched input projection for all timesteps (plain XLA).
    xs_p = jnp.zeros((T, Bp, I), jnp.float32).at[:, :B, :].set(
        xs.astype(jnp.float32))
    xproj = jnp.einsum("tbi,ih->tbh", xs_p, w1x.astype(jnp.float32)) + b1

    h0_p = jnp.zeros((Bp, Hp), jnp.float32).at[:B, :H].set(
        h0.astype(jnp.float32))

    # ---- Stage 1: serial recurrence, time-chunked grid.
    TT = _pick_time_chunk(T)
    n_chunks = T // TT
    rec_kernel = functools.partial(_recurrent_kernel, tt=TT, hp=Hp)

    rec_flops = 2 * T * Bp * Hp * HOp
    rec_bytes = 4 * (xproj.size + h0_p.size + w1h.size
                     + T * Bp * HOp + Bp * Hp)

    s1_all, h_last = pl.pallas_call(
        rec_kernel,
        out_shape=(
            jax.ShapeDtypeStruct((T, Bp, HOp), jnp.float32),
            jax.ShapeDtypeStruct((Bp, Hp), jnp.float32),
        ),
        grid_spec=pltpu.PrefetchScalarGridSpec(
            num_scalar_prefetch=0,
            grid=(n_chunks,),
            in_specs=[
                pl.BlockSpec((TT, Bp, HOp), lambda c: (c, 0, 0)),  # xproj chunk
                pl.BlockSpec((Bp, Hp), lambda c: (0, 0)),          # h0 (once)
                pl.BlockSpec(w1h.shape, lambda c: (0, 0)),         # W1h resident
            ],
            out_specs=(
                pl.BlockSpec((TT, Bp, HOp), lambda c: (c, 0, 0)),  # s1 stream
                pl.BlockSpec((Bp, Hp), lambda c: (0, 0)),          # final hidden
            ),
            scratch_shapes=[pltpu.VMEM((Bp, Hp), jnp.float32)],    # h carry
        ),
        compiler_params=pltpu.CompilerParams(
            dimension_semantics=("arbitrary",),   # recurrence is sequential
        ),
        cost_estimate=pl.CostEstimate(
            flops=rec_flops, transcendentals=0, bytes_accessed=rec_bytes),
    )(xproj, h0_p, w1h)

    # ---- Stage 2: batched o2o matmul + log_softmax over all T*Bp rows.
    M = T * Bp
    s1_flat = s1_all.reshape(M, HOp)
    TM = 256 if M >= 256 else M                  # M is a multiple of 8
    Mp = _round_up(M, TM)
    if Mp != M:
        s1_flat = jnp.zeros((Mp, HOp), jnp.float32).at[:M].set(s1_flat)

    out_flops = 2 * Mp * HOp * Op
    out_bytes = 4 * (Mp * HOp + w2.size + b2.size + Mp * Op)

    out_flat = pl.pallas_call(
        _output_kernel,
        out_shape=jax.ShapeDtypeStruct((Mp, Op), jnp.float32),
        grid_spec=pltpu.PrefetchScalarGridSpec(
            num_scalar_prefetch=0,
            grid=(Mp // TM,),
            in_specs=[
                pl.BlockSpec((TM, HOp), lambda i: (i, 0)),
                pl.BlockSpec(w2.shape, lambda i: (0, 0)),
                pl.BlockSpec(b2.shape, lambda i: (0, 0)),
            ],
            out_specs=pl.BlockSpec((TM, Op), lambda i: (i, 0)),
        ),
        compiler_params=pltpu.CompilerParams(
            dimension_semantics=("parallel",),    # megacore-shardable (v7x)
        ),
        cost_estimate=pl.CostEstimate(
            flops=out_flops, transcendentals=Mp * (Op + 1),
            bytes_accessed=out_bytes),
    )(s1_flat, w2, b2)

    out = out_flat[:M].reshape(T, Bp, Op)
    return out[:, :B, :O], h_last[:B, :H]


def rnn_forward_sequence(xs, h0, prep):
    """xs: [T, B, I], h0: [B, H] -> (log_probs [T, B, O], hidden [B, H])."""
    return _rnn_sequence_impl(xs, h0, prep["W1x"], prep["W1h"], prep["b1"],
                              prep["W2"], prep["b2"], dims=prep["dims"])


def rnn_forward(x, h, prep):
    """Single step — matches RNN.forward(input, hidden) of the PyTorch module."""
    outs, h_new = _rnn_sequence_impl(x[None], h, prep["W1x"], prep["W1h"],
                                     prep["b1"], prep["W2"], prep["b2"],
                                     dims=prep["dims"])
    return outs[0], h_new


# ---------------------------------------------------------------------------
# Deterministic init (mimics nn.Linear's uniform(-1/sqrt(fan_in), ...)).
# ---------------------------------------------------------------------------
def init_params(key, input_size, hidden_size, output_size):
    ks = jax.random.split(key, 6)

    def lin(kw, kb, out_f, in_f):
        bound = 1.0 / jnp.sqrt(in_f)
        w = jax.random.uniform(kw, (out_f, in_f), jnp.float32, -bound, bound)
        b = jax.random.uniform(kb, (out_f,), jnp.float32, -bound, bound)
        return w, b

    w_i2h, b_i2h = lin(ks[0], ks[1], hidden_size, input_size + hidden_size)
    w_i2o, b_i2o = lin(ks[2], ks[3], output_size, input_size + hidden_size)
    w_o2o, b_oo = lin(ks[4], ks[5], output_size, hidden_size + output_size)
    return {
        "w_i2h": w_i2h, "b_i2h": b_i2h,
        "w_i2o": w_i2o, "b_i2o": b_i2o,
        "w_o2o": w_o2o, "b_oo": b_oo,
    }


def reference_forward_step(x, h, params):
    combined = jnp.concatenate([x, h], axis=1)
    h_new = combined @ params["w_i2h"].T + params["b_i2h"]
    out = combined @ params["w_i2o"].T + params["b_i2o"]
    combined2 = jnp.concatenate([h_new, out], axis=1)
    out = combined2 @ params["w_o2o"].T + params["b_oo"]
    out = jax.nn.log_softmax(out, axis=1)
    return out, h_new


if __name__ == "__main__":
    B, I, H, O = 4, 16, 32, 16
    T = 8

    key = jax.random.PRNGKey(0)
    kx, kp = jax.random.split(key, 2)

    params = init_params(kp, I, H, O)
    prep = prepare_params(params, I, H, O)     # one-time weight fusion/padding

    xs = jax.random.normal(kx, (T, B, I), jnp.float32)
    h0 = jnp.zeros((B, H), jnp.float32)        # RNN.initHidden(), batch-broadcast

    # Fused whole-sequence forward (stage-0 GEMM + 2 pallas_calls).
    outs, h_last = rnn_forward_sequence(xs, h0, prep)
    jax.block_until_ready((outs, h_last))

    # Reference: loop the PyTorch-equivalent single-step cell.
    h_ref = h0
    outs_ref = []
    for t in range(T):
        o_t, h_ref = reference_forward_step(xs[t], h_ref, params)
        outs_ref.append(o_t)
    outs_ref = jnp.stack(outs_ref)

    assert jnp.allclose(outs, outs_ref, atol=1e-3, rtol=1e-3)
    assert jnp.allclose(h_last, h_ref, atol=1e-3, rtol=1e-3)

    # Single-step API (exact semantics of RNN.forward(input, hidden)).
    out1, h1 = rnn_forward(xs[0], h0, prep)
    ref_o1, ref_h1 = reference_forward_step(xs[0], h0, params)
    assert jnp.allclose(out1, ref_o1, atol=1e-3, rtol=1e-3)
    assert jnp.allclose(h1, ref_h1, atol=1e-3, rtol=1e-3)

    print("KERNEL_OK")
</pallas_src>

<mosaic_0001>
module attributes {stable_mosaic.version = 11 : i64} {
  func.func @_recurrent_kernel(%arg0: i32, %arg1: memref<8x8x256xf32, #tpu.memory_space<vmem>>, %arg2: memref<8x128xf32, #tpu.memory_space<vmem>>, %arg3: memref<128x256xf32, #tpu.memory_space<vmem>>, %arg4: memref<8x8x256xf32, #tpu.memory_space<vmem>>, %arg5: memref<8x128xf32, #tpu.memory_space<vmem>>, %arg6: memref<8x128xf32, #tpu.memory_space<vmem>>) attributes {dimension_semantics = [#tpu.dimension_semantics<arbitrary>], iteration_bounds = array<i64: 1>, scalar_prefetch = 0 : i64, scratch_operands = 1 : i64, tpu.core_type = #tpu.core_type<tc>, window_params = [{transform_indices = @transform_0, window_bounds = array<i64: 8, 8, 256>}, {pipeline_mode = #tpu.pipeline_mode<synchronous>, transform_indices = @transform_1, window_bounds = array<i64: 8, 128>}, {pipeline_mode = #tpu.pipeline_mode<synchronous>, transform_indices = @transform_2, window_bounds = array<i64: 128, 256>}, {transform_indices = @transform_3, window_bounds = array<i64: 8, 8, 256>}, {pipeline_mode = #tpu.pipeline_mode<synchronous>, transform_indices = @transform_4, window_bounds = array<i64: 8, 128>}]} {
    %c0_i32 = arith.constant 0 : i32
    %0 = arith.cmpi eq, %arg0, %c0_i32 : i32
    %1 = arith.extui %0 : i1 to i32
    %c0_i32_0 = arith.constant 0 : i32
    %2 = arith.cmpi ne, %1, %c0_i32_0 : i32
    scf.if %2 {
      %c0_62 = arith.constant 0 : index
      %c0_63 = arith.constant 0 : index
      %96 = vector.load %arg2[%c0_62, %c0_63] : memref<8x128xf32, #tpu.memory_space<vmem>>, vector<8x128xf32>
      %c0_64 = arith.constant 0 : index
      %c0_65 = arith.constant 0 : index
      %97 = vector.load %arg6[%c0_64, %c0_65] : memref<8x128xf32, #tpu.memory_space<vmem>>, vector<8x128xf32>
      tpu.vector_store %arg6[%c0_64, %c0_65], %96 {strides = array<i32>} : memref<8x128xf32, #tpu.memory_space<vmem>>, vector<8x128xf32>,
    } else {
    }
    %c0 = arith.constant 0 : index
    %c0_1 = arith.constant 0 : index
    %3 = vector.load %arg6[%c0, %c0_1] : memref<8x128xf32, #tpu.memory_space<vmem>>, vector<8x128xf32>
    %c0_i32_2 = arith.constant 0 : i32
    %c0_3 = arith.constant 0 : index
    %c0_4 = arith.constant 0 : index
    %4 = vector.load %arg3[%c0_3, %c0_4] : memref<128x256xf32, #tpu.memory_space<vmem>>, vector<128x256xf32>
    %cst = arith.constant dense<0.000000e+00> : vector<8x256xf32>
    %5 = tpu.matmul %3, %4, %cst {dimension_numbers = #tpu.dot_dimension_numbers<[1], [0], [0], [1], [0, 0, 1, 1], [], []>} : vector<8x128xf32>, vector<128x256xf32>, vector<8x256xf32> -> vector<8x256xf32>
    %6 = arith.index_cast %c0_i32_2 : i32 to index
    %c0_5 = arith.constant 0 : index
    %c0_6 = arith.constant 0 : index
    %7 = vector.load %arg1[%6, %c0_5, %c0_6] : memref<8x8x256xf32, #tpu.memory_space<vmem>>, vector<1x8x256xf32>
    %8 = vector.shape_cast %7 : vector<1x8x256xf32> to vector<8x256xf32>
    %9 = arith.addf %5, %8 : vector<8x256xf32>
    %10 = arith.index_cast %c0_i32_2 : i32 to index
    %c0_7 = arith.constant 0 : index
    %c0_8 = arith.constant 0 : index
    %11 = vector.load %arg4[%10, %c0_7, %c0_8] : memref<8x8x256xf32, #tpu.memory_space<vmem>>, vector<1x8x256xf32>
    %12 = vector.shape_cast %11 : vector<1x8x256xf32> to vector<8x256xf32>
    %13 = vector.shape_cast %9 : vector<8x256xf32> to vector<1x8x256xf32>
    tpu.vector_store %arg4[%10, %c0_7, %c0_8], %13 {strides = array<i32>} : memref<8x8x256xf32, #tpu.memory_space<vmem>>, vector<1x8x256xf32>,
    %14 = vector.extract_strided_slice %9 {offsets = [0, 0], sizes = [8, 128], strides = [1, 1]} : vector<8x256xf32> to vector<8x128xf32>
    %c1_i32 = arith.constant 1 : i32
    %c0_9 = arith.constant 0 : index
    %c0_10 = arith.constant 0 : index
    %15 = vector.load %arg3[%c0_9, %c0_10] : memref<128x256xf32, #tpu.memory_space<vmem>>, vector<128x256xf32>
    %cst_11 = arith.constant dense<0.000000e+00> : vector<8x256xf32>
    %16 = tpu.matmul %14, %15, %cst_11 {dimension_numbers = #tpu.dot_dimension_numbers<[1], [0], [0], [1], [0, 0, 1, 1], [], []>} : vector<8x128xf32>, vector<128x256xf32>, vector<8x256xf32> -> vector<8x256xf32>
    %17 = arith.index_cast %c1_i32 : i32 to index
    %c0_12 = arith.constant 0 : index
    %c0_13 = arith.constant 0 : index
    %18 = vector.load %arg1[%17, %c0_12, %c0_13] : memref<8x8x256xf32, #tpu.memory_space<vmem>>, vector<1x8x256xf32>
    %19 = vector.shape_cast %18 : vector<1x8x256xf32> to vector<8x256xf32>
    %20 = arith.addf %16, %19 : vector<8x256xf32>
    %21 = arith.index_cast %c1_i32 : i32 to index
    %c0_14 = arith.constant 0 : index
    %c0_15 = arith.constant 0 : index
    %22 = vector.load %arg4[%21, %c0_14, %c0_15] : memref<8x8x256xf32, #tpu.memory_space<vmem>>, vector<1x8x256xf32>
    %23 = vector.shape_cast %22 : vector<1x8x256xf32> to vector<8x256xf32>
    %24 = vector.shape_cast %20 : vector<8x256xf32> to vector<1x8x256xf32>
    tpu.vector_store %arg4[%21, %c0_14, %c0_15], %24 {strides = array<i32>} : memref<8x8x256xf32, #tpu.memory_space<vmem>>, vector<1x8x256xf32>,
    %25 = vector.extract_strided_slice %20 {offsets = [0, 0], sizes = [8, 128], strides = [1, 1]} : vector<8x256xf32> to vector<8x128xf32>
    %c2_i32 = arith.constant 2 : i32
    %c0_16 = arith.constant 0 : index
    %c0_17 = arith.constant 0 : index
    %26 = vector.load %arg3[%c0_16, %c0_17] : memref<128x256xf32, #tpu.memory_space<vmem>>, vector<128x256xf32>
    %cst_18 = arith.constant dense<0.000000e+00> : vector<8x256xf32>
    %27 = tpu.matmul %25, %26, %cst_18 {dimension_numbers = #tpu.dot_dimension_numbers<[1], [0], [0], [1], [0, 0, 1, 1], [], []>} : vector<8x128xf32>, vector<128x256xf32>, vector<8x256xf32> -> vector<8x256xf32>
    %28 = arith.index_cast %c2_i32 : i32 to index
    %c0_19 = arith.constant 0 : index
    %c0_20 = arith.constant 0 : index
    %29 = vector.load %arg1[%28, %c0_19, %c0_20] : memref<8x8x256xf32, #tpu.memory_space<vmem>>, vector<1x8x256xf32>
    %30 = vector.shape_cast %29 : vector<1x8x256xf32> to vector<8x256xf32>
    %31 = arith.addf %27, %30 : vector<8x256xf32>
    %32 = arith.index_cast %c2_i32 : i32 to index
    %c0_21 = arith.constant 0 : index
    %c0_22 = arith.constant 0 : index
    %33 = vector.load %arg4[%32, %c0_21, %c0_22] : memref<8x8x256xf32, #tpu.memory_space<vmem>>, vector<1x8x256xf32>
    %34 = vector.shape_cast %33 : vector<1x8x256xf32> to vector<8x256xf32>
    %35 = vector.shape_cast %31 : vector<8x256xf32> to vector<1x8x256xf32>
    tpu.vector_store %arg4[%32, %c0_21, %c0_22], %35 {strides = array<i32>} : memref<8x8x256xf32, #tpu.memory_space<vmem>>, vector<1x8x256xf32>,
    %36 = vector.extract_strided_slice %31 {offsets = [0, 0], sizes = [8, 128], strides = [1, 1]} : vector<8x256xf32> to vector<8x128xf32>
    %c3_i32 = arith.constant 3 : i32
    %c0_23 = arith.constant 0 : index
    %c0_24 = arith.constant 0 : index
    %37 = vector.load %arg3[%c0_23, %c0_24] : memref<128x256xf32, #tpu.memory_space<vmem>>, vector<128x256xf32>
    %cst_25 = arith.constant dense<0.000000e+00> : vector<8x256xf32>
    %38 = tpu.matmul %36, %37, %cst_25 {dimension_numbers = #tpu.dot_dimension_numbers<[1], [0], [0], [1], [0, 0, 1, 1], [], []>} : vector<8x128xf32>, vector<128x256xf32>, vector<8x256xf32> -> vector<8x256xf32>
    %39 = arith.index_cast %c3_i32 : i32 to index
    %c0_26 = arith.constant 0 : index
    %c0_27 = arith.constant 0 : index
    %40 = vector.load %arg1[%39, %c0_26, %c0_27] : memref<8x8x256xf32, #tpu.memory_space<vmem>>, vector<1x8x256xf32>
    %41 = vector.shape_cast %40 : vector<1x8x256xf32> to vector<8x256xf32>
    %42 = arith.addf %38, %41 : vector<8x256xf32>
    %43 = arith.index_cast %c3_i32 : i32 to index
    %c0_28 = arith.constant 0 : index
    %c0_29 = arith.constant 0 : index
    %44 = vector.load %arg4[%43, %c0_28, %c0_29] : memref<8x8x256xf32, #tpu.memory_space<vmem>>, vector<1x8x256xf32>
    %45 = vector.shape_cast %44 : vector<1x8x256xf32> to vector<8x256xf32>
    %46 = vector.shape_cast %42 : vector<8x256xf32> to vector<1x8x256xf32>
    tpu.vector_store %arg4[%43, %c0_28, %c0_29], %46 {strides = array<i32>} : memref<8x8x256xf32, #tpu.memory_space<vmem>>, vector<1x8x256xf32>,
    %47 = vector.extract_strided_slice %42 {offsets = [0, 0], sizes = [8, 128], strides = [1, 1]} : vector<8x256xf32> to vector<8x128xf32>
    %c4_i32 = arith.constant 4 : i32
    %c0_30 = arith.constant 0 : index
    %c0_31 = arith.constant 0 : index
    %48 = vector.load %arg3[%c0_30, %c0_31] : memref<128x256xf32, #tpu.memory_space<vmem>>, vector<128x256xf32>
    %cst_32 = arith.constant dense<0.000000e+00> : vector<8x256xf32>
    %49 = tpu.matmul %47, %48, %cst_32 {dimension_numbers = #tpu.dot_dimension_numbers<[1], [0], [0], [1], [0, 0, 1, 1], [], []>} : vector<8x128xf32>, vector<128x256xf32>, vector<8x256xf32> -> vector<8x256xf32>
    %50 = arith.index_cast %c4_i32 : i32 to index
    %c0_33 = arith.constant 0 : index
    %c0_34 = arith.constant 0 : index
    %51 = vector.load %arg1[%50, %c0_33, %c0_34] : memref<8x8x256xf32, #tpu.memory_space<vmem>>, vector<1x8x256xf32>
    %52 = vector.shape_cast %51 : vector<1x8x256xf32> to vector<8x256xf32>
    %53 = arith.addf %49, %52 : vector<8x256xf32>
    %54 = arith.index_cast %c4_i32 : i32 to index
    %c0_35 = arith.constant 0 : index
    %c0_36 = arith.constant 0 : index
    %55 = vector.load %arg4[%54, %c0_35, %c0_36] : memref<8x8x256xf32, #tpu.memory_space<vmem>>, vector<1x8x256xf32>
    %56 = vector.shape_cast %55 : vector<1x8x256xf32> to vector<8x256xf32>
    %57 = vector.shape_cast %53 : vector<8x256xf32> to vector<1x8x256xf32>
    tpu.vector_store %arg4[%54, %c0_35, %c0_36], %57 {strides = array<i32>} : memref<8x8x256xf32, #tpu.memory_space<vmem>>, vector<1x8x256xf32>,
    %58 = vector.extract_strided_slice %53 {offsets = [0, 0], sizes = [8, 128], strides = [1, 1]} : vector<8x256xf32> to vector<8x128xf32>
    %c5_i32 = arith.constant 5 : i32
    %c0_37 = arith.constant 0 : index
    %c0_38 = arith.constant 0 : index
    %59 = vector.load %arg3[%c0_37, %c0_38] : memref<128x256xf32, #tpu.memory_space<vmem>>, vector<128x256xf32>
    %cst_39 = arith.constant dense<0.000000e+00> : vector<8x256xf32>
    %60 = tpu.matmul %58, %59, %cst_39 {dimension_numbers = #tpu.dot_dimension_numbers<[1], [0], [0], [1], [0, 0, 1, 1], [], []>} : vector<8x128xf32>, vector<128x256xf32>, vector<8x256xf32> -> vector<8x256xf32>
    %61 = arith.index_cast %c5_i32 : i32 to index
    %c0_40 = arith.constant 0 : index
    %c0_41 = arith.constant 0 : index
    %62 = vector.load %arg1[%61, %c0_40, %c0_41] : memref<8x8x256xf32, #tpu.memory_space<vmem>>, vector<1x8x256xf32>
    %63 = vector.shape_cast %62 : vector<1x8x256xf32> to vector<8x256xf32>
    %64 = arith.addf %60, %63 : vector<8x256xf32>
    %65 = arith.index_cast %c5_i32 : i32 to index
    %c0_42 = arith.constant 0 : index
    %c0_43 = arith.constant 0 : index
    %66 = vector.load %arg4[%65, %c0_42, %c0_43] : memref<8x8x256xf32, #tpu.memory_space<vmem>>, vector<1x8x256xf32>
    %67 = vector.shape_cast %66 : vector<1x8x256xf32> to vector<8x256xf32>
    %68 = vector.shape_cast %64 : vector<8x256xf32> to vector<1x8x256xf32>
    tpu.vector_store %arg4[%65, %c0_42, %c0_43], %68 {strides = array<i32>} : memref<8x8x256xf32, #tpu.memory_space<vmem>>, vector<1x8x256xf32>,
    %69 = vector.extract_strided_slice %64 {offsets = [0, 0], sizes = [8, 128], strides = [1, 1]} : vector<8x256xf32> to vector<8x128xf32>
    %c6_i32 = arith.constant 6 : i32
    %c0_44 = arith.constant 0 : index
    %c0_45 = arith.constant 0 : index
    %70 = vector.load %arg3[%c0_44, %c0_45] : memref<128x256xf32, #tpu.memory_space<vmem>>, vector<128x256xf32>
    %cst_46 = arith.constant dense<0.000000e+00> : vector<8x256xf32>
    %71 = tpu.matmul %69, %70, %cst_46 {dimension_numbers = #tpu.dot_dimension_numbers<[1], [0], [0], [1], [0, 0, 1, 1], [], []>} : vector<8x128xf32>, vector<128x256xf32>, vector<8x256xf32> -> vector<8x256xf32>
    %72 = arith.index_cast %c6_i32 : i32 to index
    %c0_47 = arith.constant 0 : index
    %c0_48 = arith.constant 0 : index
    %73 = vector.load %arg1[%72, %c0_47, %c0_48] : memref<8x8x256xf32, #tpu.memory_space<vmem>>, vector<1x8x256xf32>
    %74 = vector.shape_cast %73 : vector<1x8x256xf32> to vector<8x256xf32>
    %75 = arith.addf %71, %74 : vector<8x256xf32>
    %76 = arith.index_cast %c6_i32 : i32 to index
    %c0_49 = arith.constant 0 : index
    %c0_50 = arith.constant 0 : index
    %77 = vector.load %arg4[%76, %c0_49, %c0_50] : memref<8x8x256xf32, #tpu.memory_space<vmem>>, vector<1x8x256xf32>
    %78 = vector.shape_cast %77 : vector<1x8x256xf32> to vector<8x256xf32>
    %79 = vector.shape_cast %75 : vector<8x256xf32> to vector<1x8x256xf32>
    tpu.vector_store %arg4[%76, %c0_49, %c0_50], %79 {strides = array<i32>} : memref<8x8x256xf32, #tpu.memory_space<vmem>>, vector<1x8x256xf32>,
    %80 = vector.extract_strided_slice %75 {offsets = [0, 0], sizes = [8, 128], strides = [1, 1]} : vector<8x256xf32> to vector<8x128xf32>
    %c7_i32 = arith.constant 7 : i32
    %c0_51 = arith.constant 0 : index
    %c0_52 = arith.constant 0 : index
    %81 = vector.load %arg3[%c0_51, %c0_52] : memref<128x256xf32, #tpu.memory_space<vmem>>, vector<128x256xf32>
    %cst_53 = arith.constant dense<0.000000e+00> : vector<8x256xf32>
    %82 = tpu.matmul %80, %81, %cst_53 {dimension_numbers = #tpu.dot_dimension_numbers<[1], [0], [0], [1], [0, 0, 1, 1], [], []>} : vector<8x128xf32>, vector<128x256xf32>, vector<8x256xf32> -> vector<8x256xf32>
    %83 = arith.index_cast %c7_i32 : i32 to index
    %c0_54 = arith.constant 0 : index
    %c0_55 = arith.constant 0 : index
    %84 = vector.load %arg1[%83, %c0_54, %c0_55] : memref<8x8x256xf32, #tpu.memory_space<vmem>>, vector<1x8x256xf32>
    %85 = vector.shape_cast %84 : vector<1x8x256xf32> to vector<8x256xf32>
    %86 = arith.addf %82, %85 : vector<8x256xf32>
    %87 = arith.index_cast %c7_i32 : i32 to index
    %c0_56 = arith.constant 0 : index
    %c0_57 = arith.constant 0 : index
    %88 = vector.load %arg4[%87, %c0_56, %c0_57] : memref<8x8x256xf32, #tpu.memory_space<vmem>>, vector<1x8x256xf32>
    %89 = vector.shape_cast %88 : vector<1x8x256xf32> to vector<8x256xf32>
    %90 = vector.shape_cast %86 : vector<8x256xf32> to vector<1x8x256xf32>
    tpu.vector_store %arg4[%87, %c0_56, %c0_57], %90 {strides = array<i32>} : memref<8x8x256xf32, #tpu.memory_space<vmem>>, vector<1x8x256xf32>,
    %91 = vector.extract_strided_slice %86 {offsets = [0, 0], sizes = [8, 128], strides = [1, 1]} : vector<8x256xf32> to vector<8x128xf32>
    %c8_i32 = arith.constant 8 : i32
    %c0_58 = arith.constant 0 : index
    %c0_59 = arith.constant 0 : index
    %92 = vector.load %arg6[%c0_58, %c0_59] : memref<8x128xf32, #tpu.memory_space<vmem>>, vector<8x128xf32>
    tpu.vector_store %arg6[%c0_58, %c0_59], %91 {strides = array<i32>} : memref<8x128xf32, #tpu.memory_space<vmem>>, vector<8x128xf32>,
    %c0_i32_60 = arith.constant 0 : i32
    %93 = arith.cmpi eq, %arg0, %c0_i32_60 : i32
    %94 = arith.extui %93 : i1 to i32
    %c0_i32_61 = arith.constant 0 : i32
    %95 = arith.cmpi ne, %94, %c0_i32_61 : i32
    scf.if %95 {
      %c0_62 = arith.constant 0 : index
      %c0_63 = arith.constant 0 : index
      %96 = vector.load %arg5[%c0_62, %c0_63] : memref<8x128xf32, #tpu.memory_space<vmem>>, vector<8x128xf32>
      tpu.vector_store %arg5[%c0_62, %c0_63], %91 {strides = array<i32>} : memref<8x128xf32, #tpu.memory_space<vmem>>, vector<8x128xf32>,
    } else {
    }
    return
  }
  func.func @transform_0(%arg0: i32) -> (i32, i32, i32) {
    %c0_i32 = arith.constant 0 : i32
    %c0_i32_0 = arith.constant 0 : i32
    %c0_i32_1 = arith.constant 0 : i32
    return %arg0, %c0_i32, %c0_i32_0 : i32, i32, i32
  }
  func.func @transform_1(%arg0: i32) -> (i32, i32) {
    %c0_i32 = arith.constant 0 : i32
    %c0_i32_0 = arith.constant 0 : i32
    %c0_i32_1 = arith.constant 0 : i32
    return %c0_i32, %c0_i32_0 : i32, i32
  }
  func.func @transform_2(%arg0: i32) -> (i32, i32) {
    %c0_i32 = arith.constant 0 : i32
    %c0_i32_0 = arith.constant 0 : i32
    %c0_i32_1 = arith.constant 0 : i32
    return %c0_i32, %c0_i32_0 : i32, i32
  }
  func.func @transform_3(%arg0: i32) -> (i32, i32, i32) {
    %c0_i32 = arith.constant 0 : i32
    %c0_i32_0 = arith.constant 0 : i32
    %c0_i32_1 = arith.constant 0 : i32
    return %arg0, %c0_i32, %c0_i32_0 : i32, i32, i32
  }
  func.func @transform_4(%arg0: i32) -> (i32, i32) {
    %c0_i32 = arith.constant 0 : i32
    %c0_i32_0 = arith.constant 0 : i32
    %c0_i32_1 = arith.constant 0 : i32
    return %c0_i32, %c0_i32_0 : i32, i32
  }
}

module attributes {stable_mosaic.version = 11 : i64} {
  func.func @_output_kernel(%arg0: i32, %arg1: memref<64x256xf32, #tpu.memory_space<vmem>>, %arg2: memref<256x128xf32, #tpu.memory_space<vmem>>, %arg3: memref<1x128xf32, #tpu.memory_space<vmem>>, %arg4: memref<64x128xf32, #tpu.memory_space<vmem>>) attributes {dimension_semantics = [#tpu.dimension_semantics<parallel>], iteration_bounds = array<i64: 1>, scalar_prefetch = 0 : i64, scratch_operands = 0 : i64, tpu.core_type = #tpu.core_type<tc>, window_params = [{transform_indices = @transform_0, window_bounds = array<i64: 64, 256>}, {pipeline_mode = #tpu.pipeline_mode<synchronous>, transform_indices = @transform_1, window_bounds = array<i64: 256, 128>}, {pipeline_mode = #tpu.pipeline_mode<synchronous>, transform_indices = @transform_2, window_bounds = array<i64: 1, 128>}, {transform_indices = @transform_3, window_bounds = array<i64: 64, 128>}]} {
    %c0 = arith.constant 0 : index
    %c0_0 = arith.constant 0 : index
    %0 = vector.load %arg1[%c0, %c0_0] : memref<64x256xf32, #tpu.memory_space<vmem>>, vector<64x256xf32>
    %c0_1 = arith.constant 0 : index
    %c0_2 = arith.constant 0 : index
    %1 = vector.load %arg2[%c0_1, %c0_2] : memref<256x128xf32, #tpu.memory_space<vmem>>, vector<256x128xf32>
    %cst = arith.constant dense<0.000000e+00> : vector<64x128xf32>
    %2 = tpu.matmul %0, %1, %cst {dimension_numbers = #tpu.dot_dimension_numbers<[1], [0], [0], [1], [0, 0, 1, 1], [], []>} : vector<64x256xf32>, vector<256x128xf32>, vector<64x128xf32> -> vector<64x128xf32>
    %c0_3 = arith.constant 0 : index
    %c0_4 = arith.constant 0 : index
    %3 = vector.load %arg3[%c0_3, %c0_4] : memref<1x128xf32, #tpu.memory_space<vmem>>, vector<1x128xf32>
    %4 = vector.broadcast %3 : vector<1x128xf32> to vector<64x128xf32>
    %5 = arith.addf %2, %4 : vector<64x128xf32>
    %cst_5 = arith.constant dense<0xFF800000> : vector<64xf32>
    %6 = vector.multi_reduction <maximumf>, %5, %cst_5 [1] : vector<64x128xf32> to vector<64xf32>
    %7 = vector.shape_cast %6 : vector<64xf32> to vector<64x1xf32>
    %8 = vector.broadcast %7 : vector<64x1xf32> to vector<64x128xf32>
    %9 = arith.subf %5, %8 : vector<64x128xf32>
    %10 = math.exp %9 : vector<64x128xf32>
    %cst_6 = arith.constant dense<0.000000e+00> : vector<64xf32>
    %11 = vector.multi_reduction <add>, %10, %cst_6 [1] : vector<64x128xf32> to vector<64xf32>
    %12 = vector.shape_cast %11 : vector<64xf32> to vector<64x1xf32>
    %13 = math.log %12 : vector<64x1xf32>
    %14 = vector.broadcast %13 : vector<64x1xf32> to vector<64x128xf32>
    %15 = arith.subf %9, %14 : vector<64x128xf32>
    %c0_7 = arith.constant 0 : index
    %c0_8 = arith.constant 0 : index
    %16 = vector.load %arg4[%c0_7, %c0_8] : memref<64x128xf32, #tpu.memory_space<vmem>>, vector<64x128xf32>
    tpu.vector_store %arg4[%c0_7, %c0_8], %15 {strides = array<i32>} : memref<64x128xf32, #tpu.memory_space<vmem>>, vector<64x128xf32>,
    return
  }
  func.func @transform_0(%arg0: i32) -> (i32, i32) {
    %c0_i32 = arith.constant 0 : i32
    %c0_i32_0 = arith.constant 0 : i32
    return %arg0, %c0_i32 : i32, i32
  }
  func.func @transform_1(%arg0: i32) -> (i32, i32) {
    %c0_i32 = arith.constant 0 : i32
    %c0_i32_0 = arith.constant 0 : i32
    %c0_i32_1 = arith.constant 0 : i32
    return %c0_i32, %c0_i32_0 : i32, i32
  }
  func.func @transform_2(%arg0: i32) -> (i32, i32) {
    %c0_i32 = arith.constant 0 : i32
    %c0_i32_0 = arith.constant 0 : i32
    %c0_i32_1 = arith.constant 0 : i32
    return %c0_i32, %c0_i32_0 : i32, i32
  }
  func.func @transform_3(%arg0: i32) -> (i32, i32) {
    %c0_i32 = arith.constant 0 : i32
    %c0_i32_0 = arith.constant 0 : i32
    return %arg0, %c0_i32 : i32, i32
  }
}

</mosaic_0001>

<llo_original>
// kernel: _rnn_sequence_impl.3
$region0: #{_rnn_sequence_impl.3}
  #allocation0 [shape = 'u32[]', space=smem, size = 0x4, offset = 0x4, fixed_abs, tag = 'smem constant byte address 0x4 - core index']
  #allocation1 [shape = 'u32[144,128]{1,0:T(1,128)}', space=vmem, size = 0x12000, scoped, tag = 'internal scratch']
  %s0 = inlined_call_operand.vmem [shape: f32[64,256], index: 0, kind: input, shape index: {}]
  %s1 = inlined_call_operand.vmem [shape: f32[256,128], index: 1, kind: input, shape index: {}]
  %s2 = inlined_call_operand.vmem [shape: f32[1,128], index: 2, kind: input, shape index: {}]
  %s3 = inlined_call_operand.vmem [shape: f32[64,128], index: 3, kind: output, shape index: {}]
  %s4 = sld [smem:[#allocation0]]
  $region22: #{_rnn_sequence_impl.3} parent=0
    _
  %s6 = ssub.s32 1, %s4
  %s7 = scalar_select 0, %s6, %s4
  // Predicated region
  $region2: #{_rnn_sequence_impl.3} parent=0 // pred_check
    _
  $region3: #{_rnn_sequence_impl.3} parent=0 // pred_check_branch
    %9 = sbr.rel (0) target = $region5
  $region4: #{_rnn_sequence_impl.3} parent=0 // pred_region
    _
  $region5: #{_rnn_sequence_impl.3} parent=0 // pred_fallthru
    _
  // Predicated region
  $region6: #{_rnn_sequence_impl.3} parent=0 // pred_check
    _
  $region7: #{_rnn_sequence_impl.3} parent=0 // pred_check_branch
    %11 = sbr.rel (0) target = $region9
  $region8: #{_rnn_sequence_impl.3} parent=0 // pred_region
    _
  $region9: #{_rnn_sequence_impl.3} parent=0 // pred_fallthru
    _
  // Predicated region
  $region10: #{_rnn_sequence_impl.3} parent=0 // pred_check
    _
  $region11: #{_rnn_sequence_impl.3} parent=0 // pred_check_branch
    %13 = sbr.rel (0) target = $region13
  $region12: #{_rnn_sequence_impl.3} parent=0 // pred_region
    _
  $region13: #{_rnn_sequence_impl.3} parent=0 // pred_fallthru
    _
  %v14 = vld [vmem:[%s0] sm:$0xff]
  %v15 = vld [vmem:[%s0 + $0x8] sm:$0xff]
  %v16 = vld [vmem:[%s0 + $0x10] sm:$0xff]
  %v17 = vld [vmem:[%s0 + $0x18] sm:$0xff]
  %v18 = vld [vmem:[%s0 + $0x20] sm:$0xff]
  %v19 = vld [vmem:[%s0 + $0x28] sm:$0xff]
  %v20 = vld [vmem:[%s0 + $0x30] sm:$0xff]
  %v21 = vld [vmem:[%s0 + $0x38] sm:$0xff]
  %v22 = vld [vmem:[%s0 + $0x40] sm:$0xff]
  %v23 = vld [vmem:[%s0 + $0x48] sm:$0xff]
  %v24 = vld [vmem:[%s0 + $0x50] sm:$0xff]
  %v25 = vld [vmem:[%s0 + $0x58] sm:$0xff]
  %v26 = vld [vmem:[%s0 + $0x60] sm:$0xff]
  %v27 = vld [vmem:[%s0 + $0x68] sm:$0xff]
  %v28 = vld [vmem:[%s0 + $0x70] sm:$0xff]
  %v29 = vld [vmem:[%s0 + $0x78] sm:$0xff]
  %v30 = vld [vmem:[%s1] sm:$0xff]
  %v31 = vld [vmem:[%s1 + $0x8] sm:$0xff]
  %v32 = vld [vmem:[%s1 + $0x10] sm:$0xff]
  %v33 = vld [vmem:[%s1 + $0x18] sm:$0xff]
  %v34 = vld [vmem:[%s1 + $0x20] sm:$0xff]
  %v35 = vld [vmem:[%s1 + $0x28] sm:$0xff]
  %v36 = vld [vmem:[%s1 + $0x30] sm:$0xff]
  %v37 = vld [vmem:[%s1 + $0x38] sm:$0xff]
  %v38 = vld [vmem:[%s1 + $0x40] sm:$0xff]
  %v39 = vld [vmem:[%s1 + $0x48] sm:$0xff]
  %v40 = vld [vmem:[%s1 + $0x50] sm:$0xff]
  %v41 = vld [vmem:[%s1 + $0x58] sm:$0xff]
  %v42 = vld [vmem:[%s1 + $0x60] sm:$0xff]
  %v43 = vld [vmem:[%s1 + $0x68] sm:$0xff]
  %v44 = vld [vmem:[%s1 + $0x70] sm:$0xff]
  %v45 = vld [vmem:[%s1 + $0x78] sm:$0xff]
  %v46 = vld [vmem:[%s1 + $0x80] sm:$0xff]
  %v47 = vld [vmem:[%s1 + $0x88] sm:$0xff]
  %v48 = vld [vmem:[%s1 + $0x90] sm:$0xff]
  %v49 = vld [vmem:[%s1 + $0x98] sm:$0xff]
  %v50 = vld [vmem:[%s1 + $0xa0] sm:$0xff]
  %v51 = vld [vmem:[%s1 + $0xa8] sm:$0xff]
  %v52 = vld [vmem:[%s1 + $0xb0] sm:$0xff]
  %v53 = vld [vmem:[%s1 + $0xb8] sm:$0xff]
  %v54 = vld [vmem:[%s1 + $0xc0] sm:$0xff]
  %v55 = vld [vmem:[%s1 + $0xc8] sm:$0xff]
  %v56 = vld [vmem:[%s1 + $0xd0] sm:$0xff]
  %v57 = vld [vmem:[%s1 + $0xd8] sm:$0xff]
  %v58 = vld [vmem:[%s1 + $0xe0] sm:$0xff]
  %v59 = vld [vmem:[%s1 + $0xe8] sm:$0xff]
  %v60 = vld [vmem:[%s1 + $0xf0] sm:$0xff]
  %v61 = vld [vmem:[%s1 + $0xf8] sm:$0xff]
  %v62 = vld [vmem:[%s2] sm:$0x1]
  %v64 = vlaneseq
  %v65 = vshrl.u32 %v64, 7
  %v66 = vsub.s32 0, %v65
  %v67 = vrot.slane %v62, %v66
  %69 = vmatprep.subr.mxu0 0.0
  %70 = vmatpush1.msra.mxu0 %v30
  %71 = vmatprep.subr.mxu0 0.0
  %72 = vmatpush1.msra.mxu0 %v31
  %73 = vmatprep.subr.mxu0 0.0
  %74 = vmatpush1.msra.mxu0 %v32
  %75 = vmatprep.subr.mxu0 0.0
  %76 = vmatpush1.msra.mxu0 %v33
  %77 = vmatprep.subr.mxu0 0.0
  %78 = vmatpush1.msra.mxu0 %v34
  %79 = vmatprep.subr.mxu0 0.0
  %80 = vmatpush1.msra.mxu0 %v35
  %81 = vmatprep.subr.mxu0 0.0
  %82 = vmatpush1.msra.mxu0 %v36
  %83 = vmatprep.subr.mxu0 0.0
  %84 = vmatpush1.msra.mxu0 %v37
  %85 = vmatprep.subr.mxu0 0.0
  %86 = vmatpush1.msra.mxu0 %v38
  %87 = vmatprep.subr.mxu0 0.0
  %88 = vmatpush1.msra.mxu0 %v39
  %89 = vmatprep.subr.mxu0 0.0
  %90 = vmatpush1.msra.mxu0 %v40
  %91 = vmatprep.subr.mxu0 0.0
  %92 = vmatpush1.msra.mxu0 %v41
  %93 = vmatprep.subr.mxu0 0.0
  %94 = vmatpush1.msra.mxu0 %v42
  %95 = vmatprep.subr.mxu0 0.0
  %96 = vmatpush1.msra.mxu0 %v43
  %97 = vmatprep.subr.mxu0 0.0
  %98 = vmatpush1.msra.mxu0 %v44
  %99 = vmatprep.subr.mxu0 0.0
  %100 = vmatpush1.msra.mxu0 %v45
  %101 = vmatprep.subr.mxu0 0.0
  %102 = vmatpush1.msra.mxu0 %v46
  %103 = vmatprep.subr.mxu0 0.0
  %104 = vmatpush1.msra.mxu0 %v47
  %105 = vmatprep.subr.mxu0 0.0
  %106 = vmatpush1.msra.mxu0 %v48
  %107 = vmatprep.subr.mxu0 0.0
  %108 = vmatpush1.msra.mxu0 %v49
  %109 = vmatprep.subr.mxu0 0.0
  %110 = vmatpush1.msra.mxu0 %v50
  %111 = vmatprep.subr.mxu0 0.0
  %112 = vmatpush1.msra.mxu0 %v51
  %113 = vmatprep.subr.mxu0 0.0
  %114 = vmatpush1.msra.mxu0 %v52
  %115 = vmatprep.subr.mxu0 0.0
  %116 = vmatpush1.msra.mxu0 %v53
  %117 = vmatprep.subr.mxu0 0.0
  %118 = vmatpush1.msra.mxu0 %v54
  %119 = vmatprep.subr.mxu0 0.0
  %120 = vmatpush1.msra.mxu0 %v55
  %121 = vmatprep.subr.mxu0 0.0
  %122 = vmatpush1.msra.mxu0 %v56
  %123 = vmatprep.subr.mxu0 0.0
  %124 = vmatpush1.msra.mxu0 %v57
  %125 = vmatprep.subr.mxu0 0.0
  %126 = vmatpush1.msra.mxu0 %v58
  %127 = vmatprep.subr.mxu0 0.0
  %128 = vmatpush1.msra.mxu0 %v59
  %129 = vmatprep.subr.mxu0 0.0
  %130 = vmatpush1.msra.mxu0 %v60
  %131 = vmatprep.subr.mxu0 0.0
  %132 = vmatpush1.msra.mxu0 %v61
  %133 = vmatprep.mubr.f32.mxu0 %v15
  %134 = vmatmul.mubr.f32.gmra.mrb[0].mxu0 %v14
  %v135 = vpop.f32.mrb[0].mxu0
  %v136 = vadd.f32 %v67, %v135
  %v137 = vpop.f32.mrb[0].mxu0
  %138 = vmatprep.mubr.f32.mxu0 %v17
  %139 = vmatmul.mubr.f32.gmra.mrb[0].mxu0 %v16
  %v140 = vpop.f32.mrb[0].mxu0
  %v141 = vadd.f32 %v67, %v140
  %v142 = vpop.f32.mrb[0].mxu0
  %143 = vmatprep.mubr.f32.mxu0 %v19
  %144 = vmatmul.mubr.f32.gmra.mrb[0].mxu0 %v18
  %v145 = vpop.f32.mrb[0].mxu0
  %v146 = vadd.f32 %v67, %v145
  %v147 = vpop.f32.mrb[0].mxu0
  %148 = vmatprep.mubr.f32.mxu0 %v21
  %149 = vmatmul.mubr.f32.gmra.mrb[0].mxu0 %v20
  %v150 = vpop.f32.mrb[0].mxu0
  %v151 = vadd.f32 %v67, %v150
  %v152 = vpop.f32.mrb[0].mxu0
  %153 = vmatprep.mubr.f32.mxu0 %v23
  %154 = vmatmul.mubr.f32.gmra.mrb[0].mxu0 %v22
  %v155 = vpop.f32.mrb[0].mxu0
  %v156 = vadd.f32 %v67, %v155
  %v157 = vpop.f32.mrb[0].mxu0
  %158 = vmatprep.mubr.f32.mxu0 %v25
  %159 = vmatmul.mubr.f32.gmra.mrb[0].mxu0 %v24
  %v160 = vpop.f32.mrb[0].mxu0
  %v161 = vadd.f32 %v67, %v160
  %v162 = vpop.f32.mrb[0].mxu0
  %163 = vmatprep.mubr.f32.mxu0 %v27
  %164 = vmatmul.mubr.f32.gmra.mrb[0].mxu0 %v26
  %v165 = vpop.f32.mrb[0].mxu0
  %v166 = vadd.f32 %v67, %v165
  %v167 = vpop.f32.mrb[0].mxu0
  %168 = vmatprep.mubr.f32.mxu0 %v29
  %169 = vmatmul.mubr.f32.gmra.mrb[0].mxu0 %v28
  %v170 = vpop.f32.mrb[0].mxu0
  %v171 = vadd.f32 %v67, %v170
  %v172 = vpop.f32.mrb[0].mxu0
  %173 = vdwg.mxu0
  %174 = vmax.xlane.f32.xlu0 %v136
  %v175 = vpop.xlane.xlu0 %174
  %176 = vmax.xlane.f32.xlu0 %v141
  %v177 = vpop.xlane.xlu0 %176
  %178 = vmax.xlane.f32.xlu0 %v146
  %v179 = vpop.xlane.xlu0 %178
  %180 = vmax.xlane.f32.xlu0 %v151
  %v181 = vpop.xlane.xlu0 %180
  %182 = vmax.xlane.f32.xlu0 %v156
  %v183 = vpop.xlane.xlu0 %182
  %184 = vmax.xlane.f32.xlu0 %v161
  %v185 = vpop.xlane.xlu0 %184
  %186 = vmax.xlane.f32.xlu0 %v166
  %v187 = vpop.xlane.xlu0 %186
  %188 = vmax.xlane.f32.xlu0 %v171
  %v189 = vpop.xlane.xlu0 %188
  %v190 = vsub.f32 %v136, %v175
  %v191 = vsub.f32 %v141, %v177
  %v192 = vsub.f32 %v146, %v179
  %v193 = vsub.f32 %v151, %v181
  %v194 = vsub.f32 %v156, %v183
  %v195 = vsub.f32 %v161, %v185
  %v196 = vsub.f32 %v166, %v187
  %v197 = vsub.f32 %v171, %v189
  %v198 = vmul.f32 %v190, 1.442695
  %v199 = vpow.pop %v198
  %v200 = vmul.f32 %v191, 1.442695
  %v201 = vpow.pop %v200
  %v202 = vmul.f32 %v192, 1.442695
  %v203 = vpow.pop %v202
  %v204 = vmul.f32 %v193, 1.442695
  %v205 = vpow.pop %v204
  %v206 = vmul.f32 %v194, 1.442695
  %v207 = vpow.pop %v206
  %v208 = vmul.f32 %v195, 1.442695
  %v209 = vpow.pop %v208
  %v210 = vmul.f32 %v196, 1.442695
  %v211 = vpow.pop %v210
  %v212 = vmul.f32 %v197, 1.442695
  %v213 = vpow.pop %v212
  %214 = vadd.xlane.f32.xlu0 %v199
  %v215 = vpop.xlane.xlu0 %214
  %216 = vadd.xlane.f32.xlu0 %v201
  %v217 = vpop.xlane.xlu0 %216
  %218 = vadd.xlane.f32.xlu0 %v203
  %v219 = vpop.xlane.xlu0 %218
  %220 = vadd.xlane.f32.xlu0 %v205
  %v221 = vpop.xlane.xlu0 %220
  %222 = vadd.xlane.f32.xlu0 %v207
  %v223 = vpop.xlane.xlu0 %222
  %224 = vadd.xlane.f32.xlu0 %v209
  %v225 = vpop.xlane.xlu0 %224
  %226 = vadd.xlane.f32.xlu0 %v211
  %v227 = vpop.xlane.xlu0 %226
  %228 = vadd.xlane.f32.xlu0 %v213
  %v229 = vpop.xlane.xlu0 %228
  %v230 = vlog2.pop %v215
  %v231 = vmul.f32 %v230, 0.6931472
  %v232 = vlog2.pop %v217
  %v233 = vmul.f32 %v232, 0.6931472
  %v234 = vlog2.pop %v219
  %v235 = vmul.f32 %v234, 0.6931472
  %v236 = vlog2.pop %v221
  %v237 = vmul.f32 %v236, 0.6931472
  %v238 = vlog2.pop %v223
  %v239 = vmul.f32 %v238, 0.6931472
  %v240 = vlog2.pop %v225
  %v241 = vmul.f32 %v240, 0.6931472
  %v242 = vlog2.pop %v227
  %v243 = vmul.f32 %v242, 0.6931472
  %v244 = vlog2.pop %v229
  %v245 = vmul.f32 %v244, 0.6931472
  %v246 = vsub.f32 %v190, %v231
  %v247 = vsub.f32 %v191, %v233
  %v248 = vsub.f32 %v192, %v235
  %v249 = vsub.f32 %v193, %v237
  %v250 = vsub.f32 %v194, %v239
  %v251 = vsub.f32 %v195, %v241
  %v252 = vsub.f32 %v196, %v243
  %v253 = vsub.f32 %v197, %v245
  %254 = vst [vmem:[%s3] sm:$0xff] %v246
  %255 = vst [vmem:[%s3 + $0x8] sm:$0xff] %v247
  %256 = vst [vmem:[%s3 + $0x10] sm:$0xff] %v248
  %257 = vst [vmem:[%s3 + $0x18] sm:$0xff] %v249
  %258 = vst [vmem:[%s3 + $0x20] sm:$0xff] %v250
  %259 = vst [vmem:[%s3 + $0x28] sm:$0xff] %v251
  %260 = vst [vmem:[%s3 + $0x30] sm:$0xff] %v252
  %261 = vst [vmem:[%s3 + $0x38] sm:$0xff] %v253
  // Predicated region
  $region14: #{_rnn_sequence_impl.3} parent=0 // pred_check
    _
  $region15: #{_rnn_sequence_impl.3} parent=0 // pred_check_branch
    %263 = sbr.rel (0) target = $region17
  $region16: #{_rnn_sequence_impl.3} parent=0 // pred_region
    _
  $region17: #{_rnn_sequence_impl.3} parent=0 // pred_fallthru
    _
  // Predicated region
  $region18: #{_rnn_sequence_impl.3} parent=0 // pred_check
    _
  $region19: #{_rnn_sequence_impl.3} parent=0 // pred_check_branch
    %265 = sbr.rel (0) target = $region21
  $region20: #{_rnn_sequence_impl.3} parent=0 // pred_region
    _
  $region21: #{_rnn_sequence_impl.3} parent=0 // pred_fallthru
    _

// kernel: _rnn_sequence_impl.2
$region0: #{_rnn_sequence_impl.2}
  #allocation0 [shape = 'u32[]', space=smem, size = 0x4, offset = 0x4, fixed_abs, tag = 'smem constant byte address 0x4 - core index']
  #allocation1 [shape = 'u32[144,128]{1,0:T(1,128)}', space=vmem, size = 0x12000, scoped, tag = 'internal scratch']
  #allocation2 [shape = 'f32[8,128]{1,0:T(8,128)}', space=vmem, size = 0x1000, scoped, tag = 'scratch operand']
  %s0 = inlined_call_operand.vmem [shape: f32[8,8,256], index: 0, kind: input, shape index: {}]
  %s1 = inlined_call_operand.vmem [shape: f32[8,128], index: 1, kind: input, shape index: {}]
  %s2 = inlined_call_operand.hbm [shape: f32[128,256], index: 2, kind: input, shape index: {}]
  %s3 = inlined_call_operand.vmem [shape: f32[8,8,256], index: 3, kind: output, shape index: {0}]
  %s4 = inlined_call_operand.vmem [shape: f32[8,128], index: 4, kind: output, shape index: {1}]
  %5 = xla_tuple %s3, %s4
  %s6 = sld [smem:[#allocation0]]
  $region42: #{_rnn_sequence_impl.2} parent=0
    _
  %s8 = ssub.s32 1, %s6
  %s9 = scalar_select 0, %s8, %s6
  $region1: #{_rnn_sequence_impl.2} parent=0
    #allocation3 [shape = 'u8[131072]{0}', space=vmem, size = 0x20000, scoped, tag = 'input window, operand 2, single buffered']
    #allocation4 [shape = 's32[1]{0}', space=sflag, size = 0x4, scoped, tag = 'scoped memory for _rnn_sequence_impl.2']
    %10 = vsyncpa [#allocation4], 0
    // Predicated region
    $region2: #{_rnn_sequence_impl.2} parent=1 // pred_check
      _
    $region3: #{_rnn_sequence_impl.2} parent=1 // pred_check_branch
      %12 = sbr.rel (0) target = $region5
    $region4: #{_rnn_sequence_impl.2} parent=1 // pred_region
      _
    $region5: #{_rnn_sequence_impl.2} parent=1 // pred_fallthru
      _
    // Predicated region
    $region6: #{_rnn_sequence_impl.2} parent=1 // pred_check
      _
    $region7: #{_rnn_sequence_impl.2} parent=1 // pred_check_branch
      %14 = sbr.rel (0) target = $region9
    $region8: #{_rnn_sequence_impl.2} parent=1 // pred_region
      _
    $region9: #{_rnn_sequence_impl.2} parent=1 // pred_fallthru
      _
    // Predicated region
    $region10: #{_rnn_sequence_impl.2} parent=1 // pred_check
      _
    $region11: #{_rnn_sequence_impl.2} parent=1 // pred_check_branch
      %16 = sbr.rel (0) target = $region13
    $region12: #{_rnn_sequence_impl.2} parent=1 // pred_region
      %s18 = ssub.s32 4096, 4096
      %19 = vsyncadd [#allocation4], %s18
      %s20 = sshll.u32 [#allocation3], 4
      %s21 = int_to_ptr.vmem [resolvable:$true] %s20
      %26 = dma.hbm_to_vmem [thread:$0]  %s2, 4096, %s21, [#allocation4], 256, 256, 16
    $region13: #{_rnn_sequence_impl.2} parent=1 // pred_fallthru
      _
    // Predicated region
    $region14: #{_rnn_sequence_impl.2} parent=1 // pred_check
      _
    $region15: #{_rnn_sequence_impl.2} parent=1 // pred_check_branch
      %28 = sbr.rel (0) target = $region17
    $region16: #{_rnn_sequence_impl.2} parent=1 // pred_region
      %29 = dma.done [#allocation4], 4096
    $region17: #{_rnn_sequence_impl.2} parent=1 // pred_fallthru
      _
    %p30 = scmp.eq.s32.totalorder 0, 0
    // Predicated region
    $region18: #{_rnn_sequence_impl.2} parent=1 // pred_check
      %p31 = pneg %p30
    $region19: #{_rnn_sequence_impl.2} parent=1 // pred_check_branch
      %33 = sbr.rel (%p31) target = $region21
    $region20: #{_rnn_sequence_impl.2} parent=1 // pred_region
      %v34 = vld [vmem:[%s1] sm:$0xff]
      %35 = vst [vmem:[#allocation2] sm:$0xff] %v34
    $region21: #{_rnn_sequence_impl.2} parent=1 // pred_fallthru
      _
    %v36 = vld [vmem:[#allocation2] sm:$0xff]
    %v37 = vld [vmem:[#allocation3] sm:$0xff]
    %v38 = vld [vmem:[#allocation3 + $0x8] sm:$0xff]
    %v39 = vld [vmem:[#allocation3 + $0x10] sm:$0xff]
    %v40 = vld [vmem:[#allocation3 + $0x18] sm:$0xff]
    %v41 = vld [vmem:[#allocation3 + $0x20] sm:$0xff]
    %v42 = vld [vmem:[#allocation3 + $0x28] sm:$0xff]
    %v43 = vld [vmem:[#allocation3 + $0x30] sm:$0xff]
    %v44 = vld [vmem:[#allocation3 + $0x38] sm:$0xff]
    %v45 = vld [vmem:[#allocation3 + $0x40] sm:$0xff]
    %v46 = vld [vmem:[#allocation3 + $0x48] sm:$0xff]
    %v47 = vld [vmem:[#allocation3 + $0x50] sm:$0xff]
    %v48 = vld [vmem:[#allocation3 + $0x58] sm:$0xff]
    %v49 = vld [vmem:[#allocation3 + $0x60] sm:$0xff]
    %v50 = vld [vmem:[#allocation3 + $0x68] sm:$0xff]
    %v51 = vld [vmem:[#allocation3 + $0x70] sm:$0xff]
    %v52 = vld [vmem:[#allocation3 + $0x78] sm:$0xff]
    %v53 = vld [vmem:[#allocation3 + $0x80] sm:$0xff]
    %v54 = vld [vmem:[#allocation3 + $0x88] sm:$0xff]
    %v55 = vld [vmem:[#allocation3 + $0x90] sm:$0xff]
    %v56 = vld [vmem:[#allocation3 + $0x98] sm:$0xff]
    %v57 = vld [vmem:[#allocation3 + $0xa0] sm:$0xff]
    %v58 = vld [vmem:[#allocation3 + $0xa8] sm:$0xff]
    %v59 = vld [vmem:[#allocation3 + $0xb0] sm:$0xff]
    %v60 = vld [vmem:[#allocation3 + $0xb8] sm:$0xff]
    %v61 = vld [vmem:[#allocation3 + $0xc0] sm:$0xff]
    %v62 = vld [vmem:[#allocation3 + $0xc8] sm:$0xff]
    %v63 = vld [vmem:[#allocation3 + $0xd0] sm:$0xff]
    %v64 = vld [vmem:[#allocation3 + $0xd8] sm:$0xff]
    %v65 = vld [vmem:[#allocation3 + $0xe0] sm:$0xff]
    %v66 = vld [vmem:[#allocation3 + $0xe8] sm:$0xff]
    %v67 = vld [vmem:[#allocation3 + $0xf0] sm:$0xff]
    %v68 = vld [vmem:[#allocation3 + $0xf8] sm:$0xff]
    %v69 = vld [vmem:[%s0] sm:$0xff]
    %v70 = vld [vmem:[%s0 + $0x8] sm:$0xff]
    %71 = vmatprep.subr.mxu0 %v38
    %72 = vmatpush1.msra.mxu0 %v37
    %73 = vmatprep.subr.mxu0 %v40
    %74 = vmatpush1.msra.mxu0 %v39
    %75 = vmatprep.subr.mxu0 %v42
    %76 = vmatpush1.msra.mxu0 %v41
    %77 = vmatprep.subr.mxu0 %v44
    %78 = vmatpush1.msra.mxu0 %v43
    %79 = vmatprep.subr.mxu0 %v46
    %80 = vmatpush1.msra.mxu0 %v45
    %81 = vmatprep.subr.mxu0 %v48
    %82 = vmatpush1.msra.mxu0 %v47
    %83 = vmatprep.subr.mxu0 %v50
    %84 = vmatpush1.msra.mxu0 %v49
    %85 = vmatprep.subr.mxu0 %v52
    %86 = vmatpush1.msra.mxu0 %v51
    %87 = vmatprep.subr.mxu0 %v54
    %88 = vmatpush1.msra.mxu0 %v53
    %89 = vmatprep.subr.mxu0 %v56
    %90 = vmatpush1.msra.mxu0 %v55
    %91 = vmatprep.subr.mxu0 %v58
    %92 = vmatpush1.msra.mxu0 %v57
    %93 = vmatprep.subr.mxu0 %v60
    %94 = vmatpush1.msra.mxu0 %v59
    %95 = vmatprep.subr.mxu0 %v62
    %96 = vmatpush1.msra.mxu0 %v61
    %97 = vmatprep.subr.mxu0 %v64
    %98 = vmatpush1.msra.mxu0 %v63
    %99 = vmatprep.subr.mxu0 %v66
    %100 = vmatpush1.msra.mxu0 %v65
    %101 = vmatprep.subr.mxu0 %v68
    %102 = vmatpush1.msra.mxu0 %v67
    %103 = vmatprep.subr.mxu0 0.0
    %104 = vmatpush1.msra.mxu0 0.0
    %105 = vmatprep.subr.mxu0 0.0
    %106 = vmatpush1.msra.mxu0 0.0
    %107 = vmatprep.subr.mxu0 0.0
    %108 = vmatpush1.msra.mxu0 0.0
    %109 = vmatprep.subr.mxu0 0.0
    %110 = vmatpush1.msra.mxu0 0.0
    %111 = vmatprep.subr.mxu0 0.0
    %112 = vmatpush1.msra.mxu0 0.0
    %113 = vmatprep.subr.mxu0 0.0
    %114 = vmatpush1.msra.mxu0 0.0
    %115 = vmatprep.subr.mxu0 0.0
    %116 = vmatpush1.msra.mxu0 0.0
    %117 = vmatprep.subr.mxu0 0.0
    %118 = vmatpush1.msra.mxu0 0.0
    %119 = vmatprep.subr.mxu0 0.0
    %120 = vmatpush1.msra.mxu0 0.0
    %121 = vmatprep.subr.mxu0 0.0
    %122 = vmatpush1.msra.mxu0 0.0
    %123 = vmatprep.subr.mxu0 0.0
    %124 = vmatpush1.msra.mxu0 0.0
    %125 = vmatprep.subr.mxu0 0.0
    %126 = vmatpush1.msra.mxu0 0.0
    %127 = vmatprep.subr.mxu0 0.0
    %128 = vmatpush1.msra.mxu0 0.0
    %129 = vmatprep.subr.mxu0 0.0
    %130 = vmatpush1.msra.mxu0 0.0
    %131 = vmatprep.subr.mxu0 0.0
    %132 = vmatpush1.msra.mxu0 0.0
    %133 = vmatprep.subr.mxu0 0.0
    %134 = vmatpush1.msra.mxu0 0.0
    %135 = vmatprep.mubr.f32.mxu0 0.0
    %136 = vmatmul.mubr.f32.gmra.mrb[0].mxu0 %v36
    %v137 = vpop.f32.mrb[0].mxu0
    %v138 = vadd.f32 %v69, %v137
    %v139 = vpop.f32.mrb[0].mxu0
    %v140 = vadd.f32 %v70, %v139
    %141 = vdwg.mxu0
    %142 = vst [vmem:[%s3] sm:$0xff] %v138
    %143 = vst [vmem:[%s3 + $0x8] sm:$0xff] %v140
    %v144 = vld [vmem:[#allocation3] sm:$0xff]
    %v145 = vld [vmem:[#allocation3 + $0x8] sm:$0xff]
    %v146 = vld [vmem:[#allocation3 + $0x10] sm:$0xff]
    %v147 = vld [vmem:[#allocation3 + $0x18] sm:$0xff]
    %v148 = vld [vmem:[#allocation3 + $0x20] sm:$0xff]
    %v149 = vld [vmem:[#allocation3 + $0x28] sm:$0xff]
    %v150 = vld [vmem:[#allocation3 + $0x30] sm:$0xff]
    %v151 = vld [vmem:[#allocation3 + $0x38] sm:$0xff]
    %v152 = vld [vmem:[#allocation3 + $0x40] sm:$0xff]
    %v153 = vld [vmem:[#allocation3 + $0x48] sm:$0xff]
    %v154 = vld [vmem:[#allocation3 + $0x50] sm:$0xff]
    %v155 = vld [vmem:[#allocation3 + $0x58] sm:$0xff]
    %v156 = vld [vmem:[#allocation3 + $0x60] sm:$0xff]
    %v157 = vld [vmem:[#allocation3 + $0x68] sm:$0xff]
    %v158 = vld [vmem:[#allocation3 + $0x70] sm:$0xff]
    %v159 = vld [vmem:[#allocation3 + $0x78] sm:$0xff]
    %v160 = vld [vmem:[#allocation3 + $0x80] sm:$0xff]
    %v161 = vld [vmem:[#allocation3 + $0x88] sm:$0xff]
    %v162 = vld [vmem:[#allocation3 + $0x90] sm:$0xff]
    %v163 = vld [vmem:[#allocation3 + $0x98] sm:$0xff]
    %v164 = vld [vmem:[#allocation3 + $0xa0] sm:$0xff]
    %v165 = vld [vmem:[#allocation3 + $0xa8] sm:$0xff]
    %v166 = vld [vmem:[#allocation3 + $0xb0] sm:$0xff]
    %v167 = vld [vmem:[#allocation3 + $0xb8] sm:$0xff]
    %v168 = vld [vmem:[#allocation3 + $0xc0] sm:$0xff]
    %v169 = vld [vmem:[#allocation3 + $0xc8] sm:$0xff]
    %v170 = vld [vmem:[#allocation3 + $0xd0] sm:$0xff]
    %v171 = vld [vmem:[#allocation3 + $0xd8] sm:$0xff]
    %v172 = vld [vmem:[#allocation3 + $0xe0] sm:$0xff]
    %v173 = vld [vmem:[#allocation3 + $0xe8] sm:$0xff]
    %v174 = vld [vmem:[#allocation3 + $0xf0] sm:$0xff]
    %v175 = vld [vmem:[#allocation3 + $0xf8] sm:$0xff]
    %s176 = scalar_lea.vmem %s0, 16
    %v177 = vld [vmem:[%s176] sm:$0xff]
    %v178 = vld [vmem:[%s176 + $0x8] sm:$0xff]
    %179 = vmatprep.subr.mxu0 %v145
    %180 = vmatpush1.msra.mxu0 %v144
    %181 = vmatprep.subr.mxu0 %v147
    %182 = vmatpush1.msra.mxu0 %v146
    %183 = vmatprep.subr.mxu0 %v149
    %184 = vmatpush1.msra.mxu0 %v148
    %185 = vmatprep.subr.mxu0 %v151
    %186 = vmatpush1.msra.mxu0 %v150
    %187 = vmatprep.subr.mxu0 %v153
    %188 = vmatpush1.msra.mxu0 %v152
    %189 = vmatprep.subr.mxu0 %v155
    %190 = vmatpush1.msra.mxu0 %v154
    %191 = vmatprep.subr.mxu0 %v157
    %192 = vmatpush1.msra.mxu0 %v156
    %193 = vmatprep.subr.mxu0 %v159
    %194 = vmatpush1.msra.mxu0 %v158
    %195 = vmatprep.subr.mxu0 %v161
    %196 = vmatpush1.msra.mxu0 %v160
    %197 = vmatprep.subr.mxu0 %v163
    %198 = vmatpush1.msra.mxu0 %v162
    %199 = vmatprep.subr.mxu0 %v165
    %200 = vmatpush1.msra.mxu0 %v164
    %201 = vmatprep.subr.mxu0 %v167
    %202 = vmatpush1.msra.mxu0 %v166
    %203 = vmatprep.subr.mxu0 %v169
    %204 = vmatpush1.msra.mxu0 %v168
    %205 = vmatprep.subr.mxu0 %v171
    %206 = vmatpush1.msra.mxu0 %v170
    %207 = vmatprep.subr.mxu0 %v173
    %208 = vmatpush1.msra.mxu0 %v172
    %209 = vmatprep.subr.mxu0 %v175
    %210 = vmatpush1.msra.mxu0 %v174
    %211 = vmatprep.subr.mxu0 0.0
    %212 = vmatpush1.msra.mxu0 0.0
    %213 = vmatprep.subr.mxu0 0.0
    %214 = vmatpush1.msra.mxu0 0.0
    %215 = vmatprep.subr.mxu0 0.0
    %216 = vmatpush1.msra.mxu0 0.0
    %217 = vmatprep.subr.mxu0 0.0
    %218 = vmatpush1.msra.mxu0 0.0
    %219 = vmatprep.subr.mxu0 0.0
    %220 = vmatpush1.msra.mxu0 0.0
    %221 = vmatprep.subr.mxu0 0.0
    %222 = vmatpush1.msra.mxu0 0.0
    %223 = vmatprep.subr.mxu0 0.0
    %224 = vmatpush1.msra.mxu0 0.0
    %225 = vmatprep.subr.mxu0 0.0
    %226 = vmatpush1.msra.mxu0 0.0
    %227 = vmatprep.subr.mxu0 0.0
    %228 = vmatpush1.msra.mxu0 0.0
    %229 = vmatprep.subr.mxu0 0.0
    %230 = vmatpush1.msra.mxu0 0.0
    %231 = vmatprep.subr.mxu0 0.0
    %232 = vmatpush1.msra.mxu0 0.0
    %233 = vmatprep.subr.mxu0 0.0
    %234 = vmatpush1.msra.mxu0 0.0
    %235 = vmatprep.subr.mxu0 0.0
    %236 = vmatpush1.msra.mxu0 0.0
    %237 = vmatprep.subr.mxu0 0.0
    %238 = vmatpush1.msra.mxu0 0.0
    %239 = vmatprep.subr.mxu0 0.0
    %240 = vmatpush1.msra.mxu0 0.0
    %241 = vmatprep.subr.mxu0 0.0
    %242 = vmatpush1.msra.mxu0 0.0
    %243 = vmatprep.mubr.f32.mxu0 0.0
    %244 = vmatmul.mubr.f32.gmra.mrb[0].mxu0 %v138
    %v245 = vpop.f32.mrb[0].mxu0
    %v246 = vadd.f32 %v177, %v245
    %v247 = vpop.f32.mrb[0].mxu0
    %v248 = vadd.f32 %v178, %v247
    %249 = vdwg.mxu0
    %s250 = scalar_lea.vmem %s3, 16
    %251 = vst [vmem:[%s250] sm:$0xff] %v246
    %252 = vst [vmem:[%s250 + $0x8] sm:$0xff] %v248
    %v253 = vld [vmem:[#allocation3] sm:$0xff]
    %v254 = vld [vmem:[#allocation3 + $0x8] sm:$0xff]
    %v255 = vld [vmem:[#allocation3 + $0x10] sm:$0xff]
    %v256 = vld [vmem:[#allocation3 + $0x18] sm:$0xff]
    %v257 = vld [vmem:[#allocation3 + $0x20] sm:$0xff]
    %v258 = vld [vmem:[#allocation3 + $0x28] sm:$0xff]
    %v259 = vld [vmem:[#allocation3 + $0x30] sm:$0xff]
    %v260 = vld [vmem:[#allocation3 + $0x38] sm:$0xff]
    %v261 = vld [vmem:[#allocation3 + $0x40] sm:$0xff]
    %v262 = vld [vmem:[#allocation3 + $0x48] sm:$0xff]
    %v263 = vld [vmem:[#allocation3 + $0x50] sm:$0xff]
    %v264 = vld [vmem:[#allocation3 + $0x58] sm:$0xff]
    %v265 = vld [vmem:[#allocation3 + $0x60] sm:$0xff]
    %v266 = vld [vmem:[#allocation3 + $0x68] sm:$0xff]
    %v267 = vld [vmem:[#allocation3 + $0x70] sm:$0xff]
    %v268 = vld [vmem:[#allocation3 + $0x78] sm:$0xff]
    %v269 = vld [vmem:[#allocation3 + $0x80] sm:$0xff]
    %v270 = vld [vmem:[#allocation3 + $0x88] sm:$0xff]
    %v271 = vld [vmem:[#allocation3 + $0x90] sm:$0xff]
    %v272 = vld [vmem:[#allocation3 + $0x98] sm:$0xff]
    %v273 = vld [vmem:[#allocation3 + $0xa0] sm:$0xff]
    %v274 = vld [vmem:[#allocation3 + $0xa8] sm:$0xff]
    %v275 = vld [vmem:[#allocation3 + $0xb0] sm:$0xff]
    %v276 = vld [vmem:[#allocation3 + $0xb8] sm:$0xff]
    %v277 = vld [vmem:[#allocation3 + $0xc0] sm:$0xff]
    %v278 = vld [vmem:[#allocation3 + $0xc8] sm:$0xff]
    %v279 = vld [vmem:[#allocation3 + $0xd0] sm:$0xff]
    %v280 = vld [vmem:[#allocation3 + $0xd8] sm:$0xff]
    %v281 = vld [vmem:[#allocation3 + $0xe0] sm:$0xff]
    %v282 = vld [vmem:[#allocation3 + $0xe8] sm:$0xff]
    %v283 = vld [vmem:[#allocation3 + $0xf0] sm:$0xff]
    %v284 = vld [vmem:[#allocation3 + $0xf8] sm:$0xff]
    %s285 = scalar_lea.vmem %s0, 32
    %v286 = vld [vmem:[%s285] sm:$0xff]
    %v287 = vld [vmem:[%s285 + $0x8] sm:$0xff]
    %288 = vmatprep.subr.mxu0 %v254
    %289 = vmatpush1.msra.mxu0 %v253
    %290 = vmatprep.subr.mxu0 %v256
    %291 = vmatpush1.msra.mxu0 %v255
    %292 = vmatprep.subr.mxu0 %v258
    %293 = vmatpush1.msra.mxu0 %v257
    %294 = vmatprep.subr.mxu0 %v260
    %295 = vmatpush1.msra.mxu0 %v259
    %296 = vmatprep.subr.mxu0 %v262
    %297 = vmatpush1.msra.mxu0 %v261
    %298 = vmatprep.subr.mxu0 %v264
    %299 = vmatpush1.msra.mxu0 %v263
    %300 = vmatprep.subr.mxu0 %v266
    %301 = vmatpush1.msra.mxu0 %v265
    %302 = vmatprep.subr.mxu0 %v268
    %303 = vmatpush1.msra.mxu0 %v267
    %304 = vmatprep.subr.mxu0 %v270
    %305 = vmatpush1.msra.mxu0 %v269
    %306 = vmatprep.subr.mxu0 %v272
    %307 = vmatpush1.msra.mxu0 %v271
    %308 = vmatprep.subr.mxu0 %v274
    %309 = vmatpush1.msra.mxu0 %v273
    %310 = vmatprep.subr.mxu0 %v276
    %311 = vmatpush1.msra.mxu0 %v275
    %312 = vmatprep.subr.mxu0 %v278
    %313 = vmatpush1.msra.mxu0 %v277
    %314 = vmatprep.subr.mxu0 %v280
    %315 = vmatpush1.msra.mxu0 %v279
    %316 = vmatprep.subr.mxu0 %v282
    %317 = vmatpush1.msra.mxu0 %v281
    %318 = vmatprep.subr.mxu0 %v284
    %319 = vmatpush1.msra.mxu0 %v283
    %320 = vmatprep.subr.mxu0 0.0
    %321 = vmatpush1.msra.mxu0 0.0
    %322 = vmatprep.subr.mxu0 0.0
    %323 = vmatpush1.msra.mxu0 0.0
    %324 = vmatprep.subr.mxu0 0.0
    %325 = vmatpush1.msra.mxu0 0.0
    %326 = vmatprep.subr.mxu0 0.0
    %327 = vmatpush1.msra.mxu0 0.0
    %328 = vmatprep.subr.mxu0 0.0
    %329 = vmatpush1.msra.mxu0 0.0
    %330 = vmatprep.subr.mxu0 0.0
    %331 = vmatpush1.msra.mxu0 0.0
    %332 = vmatprep.subr.mxu0 0.0
    %333 = vmatpush1.msra.mxu0 0.0
    %334 = vmatprep.subr.mxu0 0.0
    %335 = vmatpush1.msra.mxu0 0.0
    %336 = vmatprep.subr.mxu0 0.0
    %337 = vmatpush1.msra.mxu0 0.0
    %338 = vmatprep.subr.mxu0 0.0
    %339 = vmatpush1.msra.mxu0 0.0
    %340 = vmatprep.subr.mxu0 0.0
    %341 = vmatpush1.msra.mxu0 0.0
    %342 = vmatprep.subr.mxu0 0.0
    %343 = vmatpush1.msra.mxu0 0.0
    %344 = vmatprep.subr.mxu0 0.0
    %345 = vmatpush1.msra.mxu0 0.0
    %346 = vmatprep.subr.mxu0 0.0
    %347 = vmatpush1.msra.mxu0 0.0
    %348 = vmatprep.subr.mxu0 0.0
    %349 = vmatpush1.msra.mxu0 0.0
    %350 = vmatprep.subr.mxu0 0.0
    %351 = vmatpush1.msra.mxu0 0.0
    %352 = vmatprep.mubr.f32.mxu0 0.0
    %353 = vmatmul.mubr.f32.gmra.mrb[0].mxu0 %v246
    %v354 = vpop.f32.mrb[0].mxu0
    %v355 = vadd.f32 %v286, %v354
    %v356 = vpop.f32.mrb[0].mxu0
    %v357 = vadd.f32 %v287, %v356
    %358 = vdwg.mxu0
    %s359 = scalar_lea.vmem %s3, 32
    %360 = vst [vmem:[%s359] sm:$0xff] %v355
    %361 = vst [vmem:[%s359 + $0x8] sm:$0xff] %v357
    %v362 = vld [vmem:[#allocation3] sm:$0xff]
    %v363 = vld [vmem:[#allocation3 + $0x8] sm:$0xff]
    %v364 = vld [vmem:[#allocation3 + $0x10] sm:$0xff]
    %v365 = vld [vmem:[#allocation3 + $0x18] sm:$0xff]
    %v366 = vld [vmem:[#allocation3 + $0x20] sm:$0xff]
    %v367 = vld [vmem:[#allocation3 + $0x28] sm:$0xff]
    %v368 = vld [vmem:[#allocation3 + $0x30] sm:$0xff]
    %v369 = vld [vmem:[#allocation3 + $0x38] sm:$0xff]
    %v370 = vld [vmem:[#allocation3 + $0x40] sm:$0xff]
    %v371 = vld [vmem:[#allocation3 + $0x48] sm:$0xff]
    %v372 = vld [vmem:[#allocation3 + $0x50] sm:$0xff]
    %v373 = vld [vmem:[#allocation3 + $0x58] sm:$0xff]
    %v374 = vld [vmem:[#allocation3 + $0x60] sm:$0xff]
    %v375 = vld [vmem:[#allocation3 + $0x68] sm:$0xff]
    %v376 = vld [vmem:[#allocation3 + $0x70] sm:$0xff]
    %v377 = vld [vmem:[#allocation3 + $0x78] sm:$0xff]
    %v378 = vld [vmem:[#allocation3 + $0x80] sm:$0xff]
    %v379 = vld [vmem:[#allocation3 + $0x88] sm:$0xff]
    %v380 = vld [vmem:[#allocation3 + $0x90] sm:$0xff]
    %v381 = vld [vmem:[#allocation3 + $0x98] sm:$0xff]
    %v382 = vld [vmem:[#allocation3 + $0xa0] sm:$0xff]
    %v383 = vld [vmem:[#allocation3 + $0xa8] sm:$0xff]
    %v384 = vld [vmem:[#allocation3 + $0xb0] sm:$0xff]
    %v385 = vld [vmem:[#allocation3 + $0xb8] sm:$0xff]
    %v386 = vld [vmem:[#allocation3 + $0xc0] sm:$0xff]
    %v387 = vld [vmem:[#allocation3 + $0xc8] sm:$0xff]
    %v388 = vld [vmem:[#allocation3 + $0xd0] sm:$0xff]
    %v389 = vld [vmem:[#allocation3 + $0xd8] sm:$0xff]
    %v390 = vld [vmem:[#allocation3 + $0xe0] sm:$0xff]
    %v391 = vld [vmem:[#allocation3 + $0xe8] sm:$0xff]
    %v392 = vld [vmem:[#allocation3 + $0xf0] sm:$0xff]
    %v393 = vld [vmem:[#allocation3 + $0xf8] sm:$0xff]
    %s394 = scalar_lea.vmem %s0, 48
    %v395 = vld [vmem:[%s394] sm:$0xff]
    %v396 = vld [vmem:[%s394 + $0x8] sm:$0xff]
    %397 = vmatprep.subr.mxu0 %v363
    %398 = vmatpush1.msra.mxu0 %v362
    %399 = vmatprep.subr.mxu0 %v365
    %400 = vmatpush1.msra.mxu0 %v364
    %401 = vmatprep.subr.mxu0 %v367
    %402 = vmatpush1.msra.mxu0 %v366
    %403 = vmatprep.subr.mxu0 %v369
    %404 = vmatpush1.msra.mxu0 %v368
    %405 = vmatprep.subr.mxu0 %v371
    %406 = vmatpush1.msra.mxu0 %v370
    %407 = vmatprep.subr.mxu0 %v373
    %408 = vmatpush1.msra.mxu0 %v372
    %409 = vmatprep.subr.mxu0 %v375
    %410 = vmatpush1.msra.mxu0 %v374
    %411 = vmatprep.subr.mxu0 %v377
    %412 = vmatpush1.msra.mxu0 %v376
    %413 = vmatprep.subr.mxu0 %v379
    %414 = vmatpush1.msra.mxu0 %v378
    %415 = vmatprep.subr.mxu0 %v381
    %416 = vmatpush1.msra.mxu0 %v380
    %417 = vmatprep.subr.mxu0 %v383
    %418 = vmatpush1.msra.mxu0 %v382
    %419 = vmatprep.subr.mxu0 %v385
    %420 = vmatpush1.msra.mxu0 %v384
    %421 = vmatprep.subr.mxu0 %v387
    %422 = vmatpush1.msra.mxu0 %v386
    %423 = vmatprep.subr.mxu0 %v389
    %424 = vmatpush1.msra.mxu0 %v388
    %425 = vmatprep.subr.mxu0 %v391
    %426 = vmatpush1.msra.mxu0 %v390
    %427 = vmatprep.subr.mxu0 %v393
    %428 = vmatpush1.msra.mxu0 %v392
    %429 = vmatprep.subr.mxu0 0.0
    %430 = vmatpush1.msra.mxu0 0.0
    %431 = vmatprep.subr.mxu0 0.0
    %432 = vmatpush1.msra.mxu0 0.0
    %433 = vmatprep.subr.mxu0 0.0
    %434 = vmatpush1.msra.mxu0 0.0
    %435 = vmatprep.subr.mxu0 0.0
    %436 = vmatpush1.msra.mxu0 0.0
    %437 = vmatprep.subr.mxu0 0.0
    %438 = vmatpush1.msra.mxu0 0.0
    %439 = vmatprep.subr.mxu0 0.0
    %440 = vmatpush1.msra.mxu0 0.0
    %441 = vmatprep.subr.mxu0 0.0
    %442 = vmatpush1.msra.mxu0 0.0
    %443 = vmatprep.subr.mxu0 0.0
    %444 = vmatpush1.msra.mxu0 0.0
    %445 = vmatprep.subr.mxu0 0.0
    %446 = vmatpush1.msra.mxu0 0.0
    %447 = vmatprep.subr.mxu0 0.0
    %448 = vmatpush1.msra.mxu0 0.0
    %449 = vmatprep.subr.mxu0 0.0
    %450 = vmatpush1.msra.mxu0 0.0
    %451 = vmatprep.subr.mxu0 0.0
    %452 = vmatpush1.msra.mxu0 0.0
    %453 = vmatprep.subr.mxu0 0.0
    %454 = vmatpush1.msra.mxu0 0.0
    %455 = vmatprep.subr.mxu0 0.0
    %456 = vmatpush1.msra.mxu0 0.0
    %457 = vmatprep.subr.mxu0 0.0
    %458 = vmatpush1.msra.mxu0 0.0
    %459 = vmatprep.subr.mxu0 0.0
    %460 = vmatpush1.msra.mxu0 0.0
    %461 = vmatprep.mubr.f32.mxu0 0.0
    %462 = vmatmul.mubr.f32.gmra.mrb[0].mxu0 %v355
    %v463 = vpop.f32.mrb[0].mxu0
    %v464 = vadd.f32 %v395, %v463
    %v465 = vpop.f32.mrb[0].mxu0
    %v466 = vadd.f32 %v396, %v465
    %467 = vdwg.mxu0
    %s468 = scalar_lea.vmem %s3, 48
    %469 = vst [vmem:[%s468] sm:$0xff] %v464
    %470 = vst [vmem:[%s468 + $0x8] sm:$0xff] %v466
    %v471 = vld [vmem:[#allocation3] sm:$0xff]
    %v472 = vld [vmem:[#allocation3 + $0x8] sm:$0xff]
    %v473 = vld [vmem:[#allocation3 + $0x10] sm:$0xff]
    %v474 = vld [vmem:[#allocation3 + $0x18] sm:$0xff]
    %v475 = vld [vmem:[#allocation3 + $0x20] sm:$0xff]
    %v476 = vld [vmem:[#allocation3 + $0x28] sm:$0xff]
    %v477 = vld [vmem:[#allocation3 + $0x30] sm:$0xff]
    %v478 = vld [vmem:[#allocation3 + $0x38] sm:$0xff]
    %v479 = vld [vmem:[#allocation3 + $0x40] sm:$0xff]
    %v480 = vld [vmem:[#allocation3 + $0x48] sm:$0xff]
    %v481 = vld [vmem:[#allocation3 + $0x50] sm:$0xff]
    %v482 = vld [vmem:[#allocation3 + $0x58] sm:$0xff]
    %v483 = vld [vmem:[#allocation3 + $0x60] sm:$0xff]
    %v484 = vld [vmem:[#allocation3 + $0x68] sm:$0xff]
    %v485 = vld [vmem:[#allocation3 + $0x70] sm:$0xff]
    %v486 = vld [vmem:[#allocation3 + $0x78] sm:$0xff]
    %v487 = vld [vmem:[#allocation3 + $0x80] sm:$0xff]
    %v488 = vld [vmem:[#allocation3 + $0x88] sm:$0xff]
    %v489 = vld [vmem:[#allocation3 + $0x90] sm:$0xff]
    %v490 = vld [vmem:[#allocation3 + $0x98] sm:$0xff]
    %v491 = vld [vmem:[#allocation3 + $0xa0] sm:$0xff]
    %v492 = vld [vmem:[#allocation3 + $0xa8] sm:$0xff]
    %v493 = vld [vmem:[#allocation3 + $0xb0] sm:$0xff]
    %v494 = vld [vmem:[#allocation3 + $0xb8] sm:$0xff]
    %v495 = vld [vmem:[#allocation3 + $0xc0] sm:$0xff]
    %v496 = vld [vmem:[#allocation3 + $0xc8] sm:$0xff]
    %v497 = vld [vmem:[#allocation3 + $0xd0] sm:$0xff]
    %v498 = vld [vmem:[#allocation3 + $0xd8] sm:$0xff]
    %v499 = vld [vmem:[#allocation3 + $0xe0] sm:$0xff]
    %v500 = vld [vmem:[#allocation3 + $0xe8] sm:$0xff]
    %v501 = vld [vmem:[#allocation3 + $0xf0] sm:$0xff]
    %v502 = vld [vmem:[#allocation3 + $0xf8] sm:$0xff]
    %s503 = scalar_lea.vmem %s0, 64
    %v504 = vld [vmem:[%s503] sm:$0xff]
    %v505 = vld [vmem:[%s503 + $0x8] sm:$0xff]
    %506 = vmatprep.subr.mxu0 %v472
    %507 = vmatpush1.msra.mxu0 %v471
    %508 = vmatprep.subr.mxu0 %v474
    %509 = vmatpush1.msra.mxu0 %v473
    %510 = vmatprep.subr.mxu0 %v476
    %511 = vmatpush1.msra.mxu0 %v475
    %512 = vmatprep.subr.mxu0 %v478
    %513 = vmatpush1.msra.mxu0 %v477
    %514 = vmatprep.subr.mxu0 %v480
    %515 = vmatpush1.msra.mxu0 %v479
    %516 = vmatprep.subr.mxu0 %v482
    %517 = vmatpush1.msra.mxu0 %v481
    %518 = vmatprep.subr.mxu0 %v484
    %519 = vmatpush1.msra.mxu0 %v483
    %520 = vmatprep.subr.mxu0 %v486
    %521 = vmatpush1.msra.mxu0 %v485
    %522 = vmatprep.subr.mxu0 %v488
    %523 = vmatpush1.msra.mxu0 %v487
    %524 = vmatprep.subr.mxu0 %v490
    %525 = vmatpush1.msra.mxu0 %v489
    %526 = vmatprep.subr.mxu0 %v492
    %527 = vmatpush1.msra.mxu0 %v491
    %528 = vmatprep.subr.mxu0 %v494
    %529 = vmatpush1.msra.mxu0 %v493
    %530 = vmatprep.subr.mxu0 %v496
    %531 = vmatpush1.msra.mxu0 %v495
    %532 = vmatprep.subr.mxu0 %v498
    %533 = vmatpush1.msra.mxu0 %v497
    %534 = vmatprep.subr.mxu0 %v500
    %535 = vmatpush1.msra.mxu0 %v499
    %536 = vmatprep.subr.mxu0 %v502
    %537 = vmatpush1.msra.mxu0 %v501
    %538 = vmatprep.subr.mxu0 0.0
    %539 = vmatpush1.msra.mxu0 0.0
    %540 = vmatprep.subr.mxu0 0.0
    %541 = vmatpush1.msra.mxu0 0.0
    %542 = vmatprep.subr.mxu0 0.0
    %543 = vmatpush1.msra.mxu0 0.0
    %544 = vmatprep.subr.mxu0 0.0
    %545 = vmatpush1.msra.mxu0 0.0
    %546 = vmatprep.subr.mxu0 0.0
    %547 = vmatpush1.msra.mxu0 0.0
    %548 = vmatprep.subr.mxu0 0.0
    %549 = vmatpush1.msra.mxu0 0.0
    %550 = vmatprep.subr.mxu0 0.0
    %551 = vmatpush1.msra.mxu0 0.0
    %552 = vmatprep.subr.mxu0 0.0
    %553 = vmatpush1.msra.mxu0 0.0
    %554 = vmatprep.subr.mxu0 0.0
    %555 = vmatpush1.msra.mxu0 0.0
    %556 = vmatprep.subr.mxu0 0.0
    %557 = vmatpush1.msra.mxu0 0.0
    %558 = vmatprep.subr.mxu0 0.0
    %559 = vmatpush1.msra.mxu0 0.0
    %560 = vmatprep.subr.mxu0 0.0
    %561 = vmatpush1.msra.mxu0 0.0
    %562 = vmatprep.subr.mxu0 0.0
    %563 = vmatpush1.msra.mxu0 0.0
    %564 = vmatprep.subr.mxu0 0.0
    %565 = vmatpush1.msra.mxu0 0.0
    %566 = vmatprep.subr.mxu0 0.0
    %567 = vmatpush1.msra.mxu0 0.0
    %568 = vmatprep.subr.mxu0 0.0
    %569 = vmatpush1.msra.mxu0 0.0
    %570 = vmatprep.mubr.f32.mxu0 0.0
    %571 = vmatmul.mubr.f32.gmra.mrb[0].mxu0 %v464
    %v572 = vpop.f32.mrb[0].mxu0
    %v573 = vadd.f32 %v504, %v572
    %v574 = vpop.f32.mrb[0].mxu0
    %v575 = vadd.f32 %v505, %v574
    %576 = vdwg.mxu0
    %s577 = scalar_lea.vmem %s3, 64
    %578 = vst [vmem:[%s577] sm:$0xff] %v573
    %579 = vst [vmem:[%s577 + $0x8] sm:$0xff] %v575
    %v580 = vld [vmem:[#allocation3] sm:$0xff]
    %v581 = vld [vmem:[#allocation3 + $0x8] sm:$0xff]
    %v582 = vld [vmem:[#allocation3 + $0x10] sm:$0xff]
    %v583 = vld [vmem:[#allocation3 + $0x18] sm:$0xff]
    %v584 = vld [vmem:[#allocation3 + $0x20] sm:$0xff]
    %v585 = vld [vmem:[#allocation3 + $0x28] sm:$0xff]
    %v586 = vld [vmem:[#allocation3 + $0x30] sm:$0xff]
    %v587 = vld [vmem:[#allocation3 + $0x38] sm:$0xff]
    %v588 = vld [vmem:[#allocation3 + $0x40] sm:$0xff]
    %v589 = vld [vmem:[#allocation3 + $0x48] sm:$0xff]
    %v590 = vld [vmem:[#allocation3 + $0x50] sm:$0xff]
    %v591 = vld [vmem:[#allocation3 + $0x58] sm:$0xff]
    %v592 = vld [vmem:[#allocation3 + $0x60] sm:$0xff]
    %v593 = vld [vmem:[#allocation3 + $0x68] sm:$0xff]
    %v594 = vld [vmem:[#allocation3 + $0x70] sm:$0xff]
    %v595 = vld [vmem:[#allocation3 + $0x78] sm:$0xff]
    %v596 = vld [vmem:[#allocation3 + $0x80] sm:$0xff]
    %v597 = vld [vmem:[#allocation3 + $0x88] sm:$0xff]
    %v598 = vld [vmem:[#allocation3 + $0x90] sm:$0xff]
    %v599 = vld [vmem:[#allocation3 + $0x98] sm:$0xff]
    %v600 = vld [vmem:[#allocation3 + $0xa0] sm:$0xff]
    %v601 = vld [vmem:[#allocation3 + $0xa8] sm:$0xff]
    %v602 = vld [vmem:[#allocation3 + $0xb0] sm:$0xff]
    %v603 = vld [vmem:[#allocation3 + $0xb8] sm:$0xff]
    %v604 = vld [vmem:[#allocation3 + $0xc0] sm:$0xff]
    %v605 = vld [vmem:[#allocation3 + $0xc8] sm:$0xff]
    %v606 = vld [vmem:[#allocation3 + $0xd0] sm:$0xff]
    %v607 = vld [vmem:[#allocation3 + $0xd8] sm:$0xff]
    %v608 = vld [vmem:[#allocation3 + $0xe0] sm:$0xff]
    %v609 = vld [vmem:[#allocation3 + $0xe8] sm:$0xff]
    %v610 = vld [vmem:[#allocation3 + $0xf0] sm:$0xff]
    %v611 = vld [vmem:[#allocation3 + $0xf8] sm:$0xff]
    %s612 = scalar_lea.vmem %s0, 80
    %v613 = vld [vmem:[%s612] sm:$0xff]
    %v614 = vld [vmem:[%s612 + $0x8] sm:$0xff]
    %615 = vmatprep.subr.mxu0 %v581
    %616 = vmatpush1.msra.mxu0 %v580
    %617 = vmatprep.subr.mxu0 %v583
    %618 = vmatpush1.msra.mxu0 %v582
    %619 = vmatprep.subr.mxu0 %v585
    %620 = vmatpush1.msra.mxu0 %v584
    %621 = vmatprep.subr.mxu0 %v587
    %622 = vmatpush1.msra.mxu0 %v586
    %623 = vmatprep.subr.mxu0 %v589
    %624 = vmatpush1.msra.mxu0 %v588
    %625 = vmatprep.subr.mxu0 %v591
    %626 = vmatpush1.msra.mxu0 %v590
    %627 = vmatprep.subr.mxu0 %v593
    %628 = vmatpush1.msra.mxu0 %v592
    %629 = vmatprep.subr.mxu0 %v595
    %630 = vmatpush1.msra.mxu0 %v594
    %631 = vmatprep.subr.mxu0 %v597
    %632 = vmatpush1.msra.mxu0 %v596
    %633 = vmatprep.subr.mxu0 %v599
    %634 = vmatpush1.msra.mxu0 %v598
    %635 = vmatprep.subr.mxu0 %v601
    %636 = vmatpush1.msra.mxu0 %v600
    %637 = vmatprep.subr.mxu0 %v603
    %638 = vmatpush1.msra.mxu0 %v602
    %639 = vmatprep.subr.mxu0 %v605
    %640 = vmatpush1.msra.mxu0 %v604
    %641 = vmatprep.subr.mxu0 %v607
    %642 = vmatpush1.msra.mxu0 %v606
    %643 = vmatprep.subr.mxu0 %v609
    %644 = vmatpush1.msra.mxu0 %v608
    %645 = vmatprep.subr.mxu0 %v611
    %646 = vmatpush1.msra.mxu0 %v610
    %647 = vmatprep.subr.mxu0 0.0
    %648 = vmatpush1.msra.mxu0 0.0
    %649 = vmatprep.subr.mxu0 0.0
    %650 = vmatpush1.msra.mxu0 0.0
    %651 = vmatprep.subr.mxu0 0.0
    %652 = vmatpush1.msra.mxu0 0.0
    %653 = vmatprep.subr.mxu0 0.0
    %654 = vmatpush1.msra.mxu0 0.0
    %655 = vmatprep.subr.mxu0 0.0
    %656 = vmatpush1.msra.mxu0 0.0
    %657 = vmatprep.subr.mxu0 0.0
    %658 = vmatpush1.msra.mxu0 0.0
    %659 = vmatprep.subr.mxu0 0.0
    %660 = vmatpush1.msra.mxu0 0.0
    %661 = vmatprep.subr.mxu0 0.0
    %662 = vmatpush1.msra.mxu0 0.0
    %663 = vmatprep.subr.mxu0 0.0
    %664 = vmatpush1.msra.mxu0 0.0
    %665 = vmatprep.subr.mxu0 0.0
    %666 = vmatpush1.msra.mxu0 0.0
    %667 = vmatprep.subr.mxu0 0.0
    %668 = vmatpush1.msra.mxu0 0.0
    %669 = vmatprep.subr.mxu0 0.0
    %670 = vmatpush1.msra.mxu0 0.0
    %671 = vmatprep.subr.mxu0 0.0
    %672 = vmatpush1.msra.mxu0 0.0
    %673 = vmatprep.subr.mxu0 0.0
    %674 = vmatpush1.msra.mxu0 0.0
    %675 = vmatprep.subr.mxu0 0.0
    %676 = vmatpush1.msra.mxu0 0.0
    %677 = vmatprep.subr.mxu0 0.0
    %678 = vmatpush1.msra.mxu0 0.0
    %679 = vmatprep.mubr.f32.mxu0 0.0
    %680 = vmatmul.mubr.f32.gmra.mrb[0].mxu0 %v573
    %v681 = vpop.f32.mrb[0].mxu0
    %v682 = vadd.f32 %v613, %v681
    %v683 = vpop.f32.mrb[0].mxu0
    %v684 = vadd.f32 %v614, %v683
    %685 = vdwg.mxu0
    %s686 = scalar_lea.vmem %s3, 80
    %687 = vst [vmem:[%s686] sm:$0xff] %v682
    %688 = vst [vmem:[%s686 + $0x8] sm:$0xff] %v684
    %v689 = vld [vmem:[#allocation3] sm:$0xff]
    %v690 = vld [vmem:[#allocation3 + $0x8] sm:$0xff]
    %v691 = vld [vmem:[#allocation3 + $0x10] sm:$0xff]
    %v692 = vld [vmem:[#allocation3 + $0x18] sm:$0xff]
    %v693 = vld [vmem:[#allocation3 + $0x20] sm:$0xff]
    %v694 = vld [vmem:[#allocation3 + $0x28] sm:$0xff]
    %v695 = vld [vmem:[#allocation3 + $0x30] sm:$0xff]
    %v696 = vld [vmem:[#allocation3 + $0x38] sm:$0xff]
    %v697 = vld [vmem:[#allocation3 + $0x40] sm:$0xff]
    %v698 = vld [vmem:[#allocation3 + $0x48] sm:$0xff]
    %v699 = vld [vmem:[#allocation3 + $0x50] sm:$0xff]
    %v700 = vld [vmem:[#allocation3 + $0x58] sm:$0xff]
    %v701 = vld [vmem:[#allocation3 + $0x60] sm:$0xff]
    %v702 = vld [vmem:[#allocation3 + $0x68] sm:$0xff]
    %v703 = vld [vmem:[#allocation3 + $0x70] sm:$0xff]
    %v704 = vld [vmem:[#allocation3 + $0x78] sm:$0xff]
    %v705 = vld [vmem:[#allocation3 + $0x80] sm:$0xff]
    %v706 = vld [vmem:[#allocation3 + $0x88] sm:$0xff]
    %v707 = vld [vmem:[#allocation3 + $0x90] sm:$0xff]
    %v708 = vld [vmem:[#allocation3 + $0x98] sm:$0xff]
    %v709 = vld [vmem:[#allocation3 + $0xa0] sm:$0xff]
    %v710 = vld [vmem:[#allocation3 + $0xa8] sm:$0xff]
    %v711 = vld [vmem:[#allocation3 + $0xb0] sm:$0xff]
    %v712 = vld [vmem:[#allocation3 + $0xb8] sm:$0xff]
    %v713 = vld [vmem:[#allocation3 + $0xc0] sm:$0xff]
    %v714 = vld [vmem:[#allocation3 + $0xc8] sm:$0xff]
    %v715 = vld [vmem:[#allocation3 + $0xd0] sm:$0xff]
    %v716 = vld [vmem:[#allocation3 + $0xd8] sm:$0xff]
    %v717 = vld [vmem:[#allocation3 + $0xe0] sm:$0xff]
    %v718 = vld [vmem:[#allocation3 + $0xe8] sm:$0xff]
    %v719 = vld [vmem:[#allocation3 + $0xf0] sm:$0xff]
    %v720 = vld [vmem:[#allocation3 + $0xf8] sm:$0xff]
    %s721 = scalar_lea.vmem %s0, 96
    %v722 = vld [vmem:[%s721] sm:$0xff]
    %v723 = vld [vmem:[%s721 + $0x8] sm:$0xff]
    %724 = vmatprep.subr.mxu0 %v690
    %725 = vmatpush1.msra.mxu0 %v689
    %726 = vmatprep.subr.mxu0 %v692
    %727 = vmatpush1.msra.mxu0 %v691
    %728 = vmatprep.subr.mxu0 %v694
    %729 = vmatpush1.msra.mxu0 %v693
    %730 = vmatprep.subr.mxu0 %v696
    %731 = vmatpush1.msra.mxu0 %v695
    %732 = vmatprep.subr.mxu0 %v698
    %733 = vmatpush1.msra.mxu0 %v697
    %734 = vmatprep.subr.mxu0 %v700
    %735 = vmatpush1.msra.mxu0 %v699
    %736 = vmatprep.subr.mxu0 %v702
    %737 = vmatpush1.msra.mxu0 %v701
    %738 = vmatprep.subr.mxu0 %v704
    %739 = vmatpush1.msra.mxu0 %v703
    %740 = vmatprep.subr.mxu0 %v706
    %741 = vmatpush1.msra.mxu0 %v705
    %742 = vmatprep.subr.mxu0 %v708
    %743 = vmatpush1.msra.mxu0 %v707
    %744 = vmatprep.subr.mxu0 %v710
    %745 = vmatpush1.msra.mxu0 %v709
    %746 = vmatprep.subr.mxu0 %v712
    %747 = vmatpush1.msra.mxu0 %v711
    %748 = vmatprep.subr.mxu0 %v714
    %749 = vmatpush1.msra.mxu0 %v713
    %750 = vmatprep.subr.mxu0 %v716
    %751 = vmatpush1.msra.mxu0 %v715
    %752 = vmatprep.subr.mxu0 %v718
    %753 = vmatpush1.msra.mxu0 %v717
    %754 = vmatprep.subr.mxu0 %v720
    %755 = vmatpush1.msra.mxu0 %v719
    %756 = vmatprep.subr.mxu0 0.0
    %757 = vmatpush1.msra.mxu0 0.0
    %758 = vmatprep.subr.mxu0 0.0
    %759 = vmatpush1.msra.mxu0 0.0
    %760 = vmatprep.subr.mxu0 0.0
    %761 = vmatpush1.msra.mxu0 0.0
    %762 = vmatprep.subr.mxu0 0.0
    %763 = vmatpush1.msra.mxu0 0.0
    %764 = vmatprep.subr.mxu0 0.0
    %765 = vmatpush1.msra.mxu0 0.0
    %766 = vmatprep.subr.mxu0 0.0
    %767 = vmatpush1.msra.mxu0 0.0
    %768 = vmatprep.subr.mxu0 0.0
    %769 = vmatpush1.msra.mxu0 0.0
    %770 = vmatprep.subr.mxu0 0.0
    %771 = vmatpush1.msra.mxu0 0.0
    %772 = vmatprep.subr.mxu0 0.0
    %773 = vmatpush1.msra.mxu0 0.0
    %774 = vmatprep.subr.mxu0 0.0
    %775 = vmatpush1.msra.mxu0 0.0
    %776 = vmatprep.subr.mxu0 0.0
    %777 = vmatpush1.msra.mxu0 0.0
    %778 = vmatprep.subr.mxu0 0.0
    %779 = vmatpush1.msra.mxu0 0.0
    %780 = vmatprep.subr.mxu0 0.0
    %781 = vmatpush1.msra.mxu0 0.0
    %782 = vmatprep.subr.mxu0 0.0
    %783 = vmatpush1.msra.mxu0 0.0
    %784 = vmatprep.subr.mxu0 0.0
    %785 = vmatpush1.msra.mxu0 0.0
    %786 = vmatprep.subr.mxu0 0.0
    %787 = vmatpush1.msra.mxu0 0.0
    %788 = vmatprep.mubr.f32.mxu0 0.0
    %789 = vmatmul.mubr.f32.gmra.mrb[0].mxu0 %v682
    %v790 = vpop.f32.mrb[0].mxu0
    %v791 = vadd.f32 %v722, %v790
    %v792 = vpop.f32.mrb[0].mxu0
    %v793 = vadd.f32 %v723, %v792
    %794 = vdwg.mxu0
    %s795 = scalar_lea.vmem %s3, 96
    %796 = vst [vmem:[%s795] sm:$0xff] %v791
    %797 = vst [vmem:[%s795 + $0x8] sm:$0xff] %v793
    %v798 = vld [vmem:[#allocation3] sm:$0xff]
    %v799 = vld [vmem:[#allocation3 + $0x8] sm:$0xff]
    %v800 = vld [vmem:[#allocation3 + $0x10] sm:$0xff]
    %v801 = vld [vmem:[#allocation3 + $0x18] sm:$0xff]
    %v802 = vld [vmem:[#allocation3 + $0x20] sm:$0xff]
    %v803 = vld [vmem:[#allocation3 + $0x28] sm:$0xff]
    %v804 = vld [vmem:[#allocation3 + $0x30] sm:$0xff]
    %v805 = vld [vmem:[#allocation3 + $0x38] sm:$0xff]
    %v806 = vld [vmem:[#allocation3 + $0x40] sm:$0xff]
    %v807 = vld [vmem:[#allocation3 + $0x48] sm:$0xff]
    %v808 = vld [vmem:[#allocation3 + $0x50] sm:$0xff]
    %v809 = vld [vmem:[#allocation3 + $0x58] sm:$0xff]
    %v810 = vld [vmem:[#allocation3 + $0x60] sm:$0xff]
    %v811 = vld [vmem:[#allocation3 + $0x68] sm:$0xff]
    %v812 = vld [vmem:[#allocation3 + $0x70] sm:$0xff]
    %v813 = vld [vmem:[#allocation3 + $0x78] sm:$0xff]
    %v814 = vld [vmem:[#allocation3 + $0x80] sm:$0xff]
    %v815 = vld [vmem:[#allocation3 + $0x88] sm:$0xff]
    %v816 = vld [vmem:[#allocation3 + $0x90] sm:$0xff]
    %v817 = vld [vmem:[#allocation3 + $0x98] sm:$0xff]
    %v818 = vld [vmem:[#allocation3 + $0xa0] sm:$0xff]
    %v819 = vld [vmem:[#allocation3 + $0xa8] sm:$0xff]
    %v820 = vld [vmem:[#allocation3 + $0xb0] sm:$0xff]
    %v821 = vld [vmem:[#allocation3 + $0xb8] sm:$0xff]
    %v822 = vld [vmem:[#allocation3 + $0xc0] sm:$0xff]
    %v823 = vld [vmem:[#allocation3 + $0xc8] sm:$0xff]
    %v824 = vld [vmem:[#allocation3 + $0xd0] sm:$0xff]
    %v825 = vld [vmem:[#allocation3 + $0xd8] sm:$0xff]
    %v826 = vld [vmem:[#allocation3 + $0xe0] sm:$0xff]
    %v827 = vld [vmem:[#allocation3 + $0xe8] sm:$0xff]
    %v828 = vld [vmem:[#allocation3 + $0xf0] sm:$0xff]
    %v829 = vld [vmem:[#allocation3 + $0xf8] sm:$0xff]
    %s830 = scalar_lea.vmem %s0, 112
    %v831 = vld [vmem:[%s830] sm:$0xff]
    %v832 = vld [vmem:[%s830 + $0x8] sm:$0xff]
    %833 = vmatprep.subr.mxu0 %v799
    %834 = vmatpush1.msra.mxu0 %v798
    %835 = vmatprep.subr.mxu0 %v801
    %836 = vmatpush1.msra.mxu0 %v800
    %837 = vmatprep.subr.mxu0 %v803
    %838 = vmatpush1.msra.mxu0 %v802
    %839 = vmatprep.subr.mxu0 %v805
    %840 = vmatpush1.msra.mxu0 %v804
    %841 = vmatprep.subr.mxu0 %v807
    %842 = vmatpush1.msra.mxu0 %v806
    %843 = vmatprep.subr.mxu0 %v809
    %844 = vmatpush1.msra.mxu0 %v808
    %845 = vmatprep.subr.mxu0 %v811
    %846 = vmatpush1.msra.mxu0 %v810
    %847 = vmatprep.subr.mxu0 %v813
    %848 = vmatpush1.msra.mxu0 %v812
    %849 = vmatprep.subr.mxu0 %v815
    %850 = vmatpush1.msra.mxu0 %v814
    %851 = vmatprep.subr.mxu0 %v817
    %852 = vmatpush1.msra.mxu0 %v816
    %853 = vmatprep.subr.mxu0 %v819
    %854 = vmatpush1.msra.mxu0 %v818
    %855 = vmatprep.subr.mxu0 %v821
    %856 = vmatpush1.msra.mxu0 %v820
    %857 = vmatprep.subr.mxu0 %v823
    %858 = vmatpush1.msra.mxu0 %v822
    %859 = vmatprep.subr.mxu0 %v825
    %860 = vmatpush1.msra.mxu0 %v824
    %861 = vmatprep.subr.mxu0 %v827
    %862 = vmatpush1.msra.mxu0 %v826
    %863 = vmatprep.subr.mxu0 %v829
    %864 = vmatpush1.msra.mxu0 %v828
    %865 = vmatprep.subr.mxu0 0.0
    %866 = vmatpush1.msra.mxu0 0.0
    %867 = vmatprep.subr.mxu0 0.0
    %868 = vmatpush1.msra.mxu0 0.0
    %869 = vmatprep.subr.mxu0 0.0
    %870 = vmatpush1.msra.mxu0 0.0
    %871 = vmatprep.subr.mxu0 0.0
    %872 = vmatpush1.msra.mxu0 0.0
    %873 = vmatprep.subr.mxu0 0.0
    %874 = vmatpush1.msra.mxu0 0.0
    %875 = vmatprep.subr.mxu0 0.0
    %876 = vmatpush1.msra.mxu0 0.0
    %877 = vmatprep.subr.mxu0 0.0
    %878 = vmatpush1.msra.mxu0 0.0
    %879 = vmatprep.subr.mxu0 0.0
    %880 = vmatpush1.msra.mxu0 0.0
    %881 = vmatprep.subr.mxu0 0.0
    %882 = vmatpush1.msra.mxu0 0.0
    %883 = vmatprep.subr.mxu0 0.0
    %884 = vmatpush1.msra.mxu0 0.0
    %885 = vmatprep.subr.mxu0 0.0
    %886 = vmatpush1.msra.mxu0 0.0
    %887 = vmatprep.subr.mxu0 0.0
    %888 = vmatpush1.msra.mxu0 0.0
    %889 = vmatprep.subr.mxu0 0.0
    %890 = vmatpush1.msra.mxu0 0.0
    %891 = vmatprep.subr.mxu0 0.0
    %892 = vmatpush1.msra.mxu0 0.0
    %893 = vmatprep.subr.mxu0 0.0
    %894 = vmatpush1.msra.mxu0 0.0
    %895 = vmatprep.subr.mxu0 0.0
    %896 = vmatpush1.msra.mxu0 0.0
    %897 = vmatprep.mubr.f32.mxu0 0.0
    %898 = vmatmul.mubr.f32.gmra.mrb[0].mxu0 %v791
    %v899 = vpop.f32.mrb[0].mxu0
    %v900 = vadd.f32 %v831, %v899
    %v901 = vpop.f32.mrb[0].mxu0
    %v902 = vadd.f32 %v832, %v901
    %903 = vdwg.mxu0
    %s904 = scalar_lea.vmem %s3, 112
    %905 = vst [vmem:[%s904] sm:$0xff] %v900
    %906 = vst [vmem:[%s904 + $0x8] sm:$0xff] %v902
    %907 = vst [vmem:[#allocation2] sm:$0xff] %v900
    // Predicated region
    $region22: #{_rnn_sequence_impl.2} parent=1 // pred_check
      %p908 = pneg %p30
    $region23: #{_rnn_sequence_impl.2} parent=1 // pred_check_branch
      %910 = sbr.rel (%p908) target = $region25
    $region24: #{_rnn_sequence_impl.2} parent=1 // pred_region
      %911 = vst [vmem:[%s4] sm:$0xff] %v900
    $region25: #{_rnn_sequence_impl.2} parent=1 // pred_fallthru
      _
    // Predicated region
    $region26: #{_rnn_sequence_impl.2} parent=1 // pred_check
      _
    $region27: #{_rnn_sequence_impl.2} parent=1 // pred_check_branch
      %913 = sbr.rel (0) target = $region29
    $region28: #{_rnn_sequence_impl.2} parent=1 // pred_region
      _
    $region29: #{_rnn_sequence_impl.2} parent=1 // pred_fallthru
      _
    // Predicated region
    $region30: #{_rnn_sequence_impl.2} parent=1 // pred_check
      _
    $region31: #{_rnn_sequence_impl.2} parent=1 // pred_check_branch
      %915 = sbr.rel (0) target = $region33
    $region32: #{_rnn_sequence_impl.2} parent=1 // pred_region
      _
    $region33: #{_rnn_sequence_impl.2} parent=1 // pred_fallthru
      _
    // Predicated region
    $region34: #{_rnn_sequence_impl.2} parent=1 // pred_check
      _
    $region35: #{_rnn_sequence_impl.2} parent=1 // pred_check_branch
      %917 = sbr.rel (0) target = $region37
    $region36: #{_rnn_sequence_impl.2} parent=1 // pred_region
      _
    $region37: #{_rnn_sequence_impl.2} parent=1 // pred_fallthru
      _
    // Predicated region
    $region38: #{_rnn_sequence_impl.2} parent=1 // pred_check
      _
    $region39: #{_rnn_sequence_impl.2} parent=1 // pred_check_branch
      %919 = sbr.rel (0) target = $region41
    $region40: #{_rnn_sequence_impl.2} parent=1 // pred_region
      _
    $region41: #{_rnn_sequence_impl.2} parent=1 // pred_fallthru
      _
    %920 = vsyncpa [#allocation4], 1

</llo_original>
